<compile_context>
chip_gen: v5e
topology: v5e:2x2
jax: 0.10.0
libtpu: 0.0.40
codegen_flags: <defaults>
</compile_context>

<pallas_src>
import functools

import jax
import jax.numpy as jnp
from jax.experimental import pallas as pl
from jax.experimental.pallas import tpu as pltpu


def _round_up(x, m):
    return ((x + m - 1) // m) * m


def _lstm_recurrence_kernel(T, Tt, Hp, gx_ref, whh_ref, out_ref, h_scr, c_scr):
    """Serial LSTM recurrence over one (batch block, time block) grid step.

    gx_ref : (Tt, Bt, 4*Hp)  precomputed x-projection + bias (time-major)
    whh_ref: (Hp, 4*Hp)      W_hh^T, resident across the grid
    out_ref: (Bt, Hp)        final hidden state (written at the last time block)
    h_scr/c_scr: (Bt, Hp) f32 state carried across time blocks
    """
    tb = pl.program_id(1)
    nt = pl.num_programs(1)

    @pl.when(tb == 0)
    def _():
        h_scr[...] = jnp.zeros_like(h_scr)
        c_scr[...] = jnp.zeros_like(c_scr)

    h = h_scr[...]                       # (Bt, Hp) f32
    c = c_scr[...]                       # (Bt, Hp) f32
    whh = whh_ref[...]                   # (Hp, 4Hp) param dtype

    needs_mask = (T % Tt) != 0           # only ragged T needs per-step predication

    # Statically unrolled inner loop over the Tt timesteps of this block.
    for j in range(Tt):
        gx_j = gx_ref[j].astype(jnp.float32)                 # (Bt, 4Hp)
        gates = gx_j + jnp.dot(h.astype(whh.dtype), whh,
                               preferred_element_type=jnp.float32)

        # PyTorch gate order [i, f, g, o]; each slice is a lane-dense 128-multiple.
        i_g = jax.nn.sigmoid(gates[:, 0 * Hp:1 * Hp])
        f_g = jax.nn.sigmoid(gates[:, 1 * Hp:2 * Hp])
        g_g = jnp.tanh(gates[:, 2 * Hp:3 * Hp])
        o_g = jax.nn.sigmoid(gates[:, 3 * Hp:4 * Hp])

        c_new = f_g * c + i_g * g_g
        h_new = o_g * jnp.tanh(c_new)

        if needs_mask:
            valid = (tb * Tt + j) < T
            h = jnp.where(valid, h_new, h)
            c = jnp.where(valid, c_new, c)
        else:
            h, c = h_new, c_new

    h_scr[...] = h
    c_scr[...] = c

    @pl.when(tb == nt - 1)
    def _():
        out_ref[...] = h.astype(out_ref.dtype)


def lstm_last_hidden(x, w_ih, w_hh, b_ih, b_hh, *,
                     param_dtype=jnp.float32, time_block=32):
    """x: (B, T, D); w_ih: (4H, D); w_hh: (4H, H); b_*: (4H,).  Returns (B, H) f32."""
    B, T, D = x.shape
    H = w_hh.shape[1]
    f32 = jnp.float32

    # ---- padding: H -> multiple of 128 lanes, B -> multiple of 8 sublanes ----
    Hp = _round_up(H, 128)
    Bt = min(_round_up(B, 8), 128)
    Bp = _round_up(B, Bt)
    Tt = max(1, min(T, time_block))
    nb = Bp // Bt
    nt = pl.cdiv(T, Tt)

    # Gate-padded parameters (gate order [i, f, g, o] preserved per gate block).
    w_ih4 = jnp.pad(w_ih.astype(f32).reshape(4, H, D), ((0, 0), (0, Hp - H), (0, 0)))
    w_hh4 = jnp.pad(w_hh.astype(f32).reshape(4, H, H),
                    ((0, 0), (0, Hp - H), (0, Hp - H)))
    b4 = jnp.pad((b_ih + b_hh).astype(f32).reshape(4, H), ((0, 0), (0, Hp - H)))

    wih_t = jnp.transpose(w_ih4, (2, 0, 1)).reshape(D, 4 * Hp)     # (D, 4Hp)
    whh_t = jnp.transpose(w_hh4, (2, 0, 1)).reshape(Hp, 4 * Hp)    # (Hp, 4Hp)
    bias = b4.reshape(1, 1, 4 * Hp)

    x_p = jnp.pad(x.astype(f32), ((0, Bp - B), (0, 0), (0, 0)))    # (Bp, T, D)

    # ---- hoisted, fully parallel input projection with folded bias ----
    # Produced directly time-major so the serial kernel reads contiguous slabs.
    gates_x = (jnp.einsum('btd,dg->tbg',
                          x_p.astype(param_dtype), wih_t.astype(param_dtype),
                          preferred_element_type=f32)
               + bias).astype(param_dtype)                          # (T, Bp, 4Hp)

    whh_t = whh_t.astype(param_dtype)

    kernel = functools.partial(_lstm_recurrence_kernel, T, Tt, Hp)

    out = pl.pallas_call(
        kernel,
        out_shape=jax.ShapeDtypeStruct((Bp, Hp), jnp.float32),
        grid_spec=pltpu.PrefetchScalarGridSpec(
            num_scalar_prefetch=0,
            grid=(nb, nt),                                          # (batch, time)
            in_specs=[
                pl.BlockSpec((Tt, Bt, 4 * Hp), lambda b, t: (t, b, 0)),  # gates_x slab
                pl.BlockSpec((Hp, 4 * Hp), lambda b, t: (0, 0)),         # W_hh^T resident
            ],
            out_specs=pl.BlockSpec((Bt, Hp), lambda b, t: (b, 0)),
            scratch_shapes=[
                pltpu.VMEM((Bt, Hp), jnp.float32),                  # h state (f32)
                pltpu.VMEM((Bt, Hp), jnp.float32),                  # c state (f32)
            ],
        ),
        compiler_params=pltpu.CompilerParams(
            # batch blocks are independent (megacore-shardable);
            # time must stay sequential.
            dimension_semantics=("parallel", "arbitrary"),
        ),
    )(gates_x, whh_t)

    return out[:B, :H]


def _lstm_reference(x, w_ih, w_hh, b_ih, b_hh):
    """Pure-JAX reference matching torch.nn.LSTM semantics (zero init state)."""
    B, T, D = x.shape
    H = w_hh.shape[1]
    bias = b_ih + b_hh

    def step(carry, x_t):
        h, c = carry
        gates = x_t @ w_ih.T + h @ w_hh.T + bias
        i = jax.nn.sigmoid(gates[:, 0 * H:1 * H])
        f = jax.nn.sigmoid(gates[:, 1 * H:2 * H])
        g = jnp.tanh(gates[:, 2 * H:3 * H])
        o = jax.nn.sigmoid(gates[:, 3 * H:4 * H])
        c = f * c + i * g
        h = o * jnp.tanh(c)
        return (h, c), None

    h0 = jnp.zeros((B, H), jnp.float32)
    c0 = jnp.zeros((B, H), jnp.float32)
    (h_T, _), _ = jax.lax.scan(step, (h0, c0), jnp.transpose(x, (1, 0, 2)))
    return h_T


if __name__ == "__main__":
    B, T, D, H = 2, 8, 4, 32

    key = jax.random.PRNGKey(0)
    kx, k1, k2, k3, k4 = jax.random.split(key, 5)

    # Deterministic parameter init (PyTorch-style uniform(-1/sqrt(H), 1/sqrt(H))).
    bound = 1.0 / jnp.sqrt(jnp.float32(H))
    x = jax.random.normal(kx, (B, T, D), jnp.float32)
    w_ih = jax.random.uniform(k1, (4 * H, D), jnp.float32, -bound, bound)
    w_hh = jax.random.uniform(k2, (4 * H, H), jnp.float32, -bound, bound)
    b_ih = jax.random.uniform(k3, (4 * H,), jnp.float32, -bound, bound)
    b_hh = jax.random.uniform(k4, (4 * H,), jnp.float32, -bound, bound)

    ref = jax.block_until_ready(_lstm_reference(x, w_ih, w_hh, b_ih, b_hh))

    # f32 matmul operands: bitwise-close to the reference.
    out = jax.block_until_ready(lstm_last_hidden(x, w_ih, w_hh, b_ih, b_hh))
    assert out.shape == (B, H)
    assert jnp.allclose(out, ref, atol=1e-5, rtol=1e-5), "f32 mismatch vs reference"

    print("KERNEL_OK")
</pallas_src>

<mosaic_0001>
module attributes {stable_mosaic.version = 11 : i64} {
  func.func @_lstm_recurrence_kernel(%arg0: i32, %arg1: i32, %arg2: memref<8x8x512xf32, #tpu.memory_space<vmem>>, %arg3: memref<128x512xf32, #tpu.memory_space<vmem>>, %arg4: memref<8x128xf32, #tpu.memory_space<vmem>>, %arg5: memref<8x128xf32, #tpu.memory_space<vmem>>, %arg6: memref<8x128xf32, #tpu.memory_space<vmem>>) attributes {dimension_semantics = [#tpu.dimension_semantics<parallel>, #tpu.dimension_semantics<arbitrary>], iteration_bounds = array<i64: 1, 1>, scalar_prefetch = 0 : i64, scratch_operands = 2 : i64, tpu.core_type = #tpu.core_type<tc>, window_params = [{transform_indices = @transform_0, window_bounds = array<i64: 8, 8, 512>}, {pipeline_mode = #tpu.pipeline_mode<synchronous>, transform_indices = @transform_1, window_bounds = array<i64: 128, 512>}, {transform_indices = @transform_2, window_bounds = array<i64: 8, 128>}]} {
    %c0_i32 = arith.constant 0 : i32
    %0 = arith.cmpi eq, %arg1, %c0_i32 : i32
    %1 = arith.extui %0 : i1 to i32
    %c0_i32_0 = arith.constant 0 : i32
    %2 = arith.cmpi ne, %1, %c0_i32_0 : i32
    scf.if %2 {
      %cst_60 = arith.constant 0.000000e+00 : f32
      %243 = vector.broadcast %cst_60 : f32 to vector<8x128xf32>
      %c0_61 = arith.constant 0 : index
      %c0_62 = arith.constant 0 : index
      %244 = vector.load %arg5[%c0_61, %c0_62] : memref<8x128xf32, #tpu.memory_space<vmem>>, vector<8x128xf32>
      tpu.vector_store %arg5[%c0_61, %c0_62], %243 {strides = array<i32>} : memref<8x128xf32, #tpu.memory_space<vmem>>, vector<8x128xf32>,
      %cst_63 = arith.constant 0.000000e+00 : f32
      %245 = vector.broadcast %cst_63 : f32 to vector<8x128xf32>
      %c0_64 = arith.constant 0 : index
      %c0_65 = arith.constant 0 : index
      %246 = vector.load %arg6[%c0_64, %c0_65] : memref<8x128xf32, #tpu.memory_space<vmem>>, vector<8x128xf32>
      tpu.vector_store %arg6[%c0_64, %c0_65], %245 {strides = array<i32>} : memref<8x128xf32, #tpu.memory_space<vmem>>, vector<8x128xf32>,
    } else {
    }
    %c0 = arith.constant 0 : index
    %c0_1 = arith.constant 0 : index
    %3 = vector.load %arg5[%c0, %c0_1] : memref<8x128xf32, #tpu.memory_space<vmem>>, vector<8x128xf32>
    %c0_2 = arith.constant 0 : index
    %c0_3 = arith.constant 0 : index
    %4 = vector.load %arg6[%c0_2, %c0_3] : memref<8x128xf32, #tpu.memory_space<vmem>>, vector<8x128xf32>
    %c0_4 = arith.constant 0 : index
    %c0_5 = arith.constant 0 : index
    %5 = vector.load %arg3[%c0_4, %c0_5] : memref<128x512xf32, #tpu.memory_space<vmem>>, vector<128x512xf32>
    %c0_6 = arith.constant 0 : index
    %c0_7 = arith.constant 0 : index
    %c0_8 = arith.constant 0 : index
    %6 = vector.load %arg2[%c0_6, %c0_7, %c0_8] : memref<8x8x512xf32, #tpu.memory_space<vmem>>, vector<1x8x512xf32>
    %7 = vector.shape_cast %6 : vector<1x8x512xf32> to vector<8x512xf32>
    %cst = arith.constant dense<0.000000e+00> : vector<8x512xf32>
    %8 = tpu.matmul %3, %5, %cst {dimension_numbers = #tpu.dot_dimension_numbers<[1], [0], [0], [1], [0, 0, 1, 1], [], []>} : vector<8x128xf32>, vector<128x512xf32>, vector<8x512xf32> -> vector<8x512xf32>
    %9 = arith.addf %7, %8 : vector<8x512xf32>
    %10 = vector.extract_strided_slice %9 {offsets = [0, 0], sizes = [8, 128], strides = [1, 1]} : vector<8x512xf32> to vector<8x128xf32>
    %11 = arith.negf %10 : vector<8x128xf32>
    %12 = math.exp %11 : vector<8x128xf32>
    %cst_9 = arith.constant 1.000000e+00 : f32
    %13 = vector.broadcast %cst_9 : f32 to vector<8x128xf32>
    %14 = arith.addf %13, %12 : vector<8x128xf32>
    %15 = arith.divf %13, %14 : vector<8x128xf32>
    %16 = vector.extract_strided_slice %9 {offsets = [0, 128], sizes = [8, 128], strides = [1, 1]} : vector<8x512xf32> to vector<8x128xf32>
    %17 = arith.negf %16 : vector<8x128xf32>
    %18 = math.exp %17 : vector<8x128xf32>
    %cst_10 = arith.constant 1.000000e+00 : f32
    %19 = vector.broadcast %cst_10 : f32 to vector<8x128xf32>
    %20 = arith.addf %19, %18 : vector<8x128xf32>
    %21 = arith.divf %19, %20 : vector<8x128xf32>
    %22 = vector.extract_strided_slice %9 {offsets = [0, 256], sizes = [8, 128], strides = [1, 1]} : vector<8x512xf32> to vector<8x128xf32>
    %23 = math.tanh %22 : vector<8x128xf32>
    %24 = vector.extract_strided_slice %9 {offsets = [0, 384], sizes = [8, 128], strides = [1, 1]} : vector<8x512xf32> to vector<8x128xf32>
    %25 = arith.negf %24 : vector<8x128xf32>
    %26 = math.exp %25 : vector<8x128xf32>
    %cst_11 = arith.constant 1.000000e+00 : f32
    %27 = vector.broadcast %cst_11 : f32 to vector<8x128xf32>
    %28 = arith.addf %27, %26 : vector<8x128xf32>
    %29 = arith.divf %27, %28 : vector<8x128xf32>
    %30 = arith.mulf %21, %4 : vector<8x128xf32>
    %31 = arith.mulf %15, %23 : vector<8x128xf32>
    %32 = arith.addf %30, %31 : vector<8x128xf32>
    %33 = math.tanh %32 : vector<8x128xf32>
    %34 = arith.mulf %29, %33 : vector<8x128xf32>
    %c1 = arith.constant 1 : index
    %c0_12 = arith.constant 0 : index
    %c0_13 = arith.constant 0 : index
    %35 = vector.load %arg2[%c1, %c0_12, %c0_13] : memref<8x8x512xf32, #tpu.memory_space<vmem>>, vector<1x8x512xf32>
    %36 = vector.shape_cast %35 : vector<1x8x512xf32> to vector<8x512xf32>
    %cst_14 = arith.constant dense<0.000000e+00> : vector<8x512xf32>
    %37 = tpu.matmul %34, %5, %cst_14 {dimension_numbers = #tpu.dot_dimension_numbers<[1], [0], [0], [1], [0, 0, 1, 1], [], []>} : vector<8x128xf32>, vector<128x512xf32>, vector<8x512xf32> -> vector<8x512xf32>
    %38 = arith.addf %36, %37 : vector<8x512xf32>
    %39 = vector.extract_strided_slice %38 {offsets = [0, 0], sizes = [8, 128], strides = [1, 1]} : vector<8x512xf32> to vector<8x128xf32>
    %40 = arith.negf %39 : vector<8x128xf32>
    %41 = math.exp %40 : vector<8x128xf32>
    %cst_15 = arith.constant 1.000000e+00 : f32
    %42 = vector.broadcast %cst_15 : f32 to vector<8x128xf32>
    %43 = arith.addf %42, %41 : vector<8x128xf32>
    %44 = arith.divf %42, %43 : vector<8x128xf32>
    %45 = vector.extract_strided_slice %38 {offsets = [0, 128], sizes = [8, 128], strides = [1, 1]} : vector<8x512xf32> to vector<8x128xf32>
    %46 = arith.negf %45 : vector<8x128xf32>
    %47 = math.exp %46 : vector<8x128xf32>
    %cst_16 = arith.constant 1.000000e+00 : f32
    %48 = vector.broadcast %cst_16 : f32 to vector<8x128xf32>
    %49 = arith.addf %48, %47 : vector<8x128xf32>
    %50 = arith.divf %48, %49 : vector<8x128xf32>
    %51 = vector.extract_strided_slice %38 {offsets = [0, 256], sizes = [8, 128], strides = [1, 1]} : vector<8x512xf32> to vector<8x128xf32>
    %52 = math.tanh %51 : vector<8x128xf32>
    %53 = vector.extract_strided_slice %38 {offsets = [0, 384], sizes = [8, 128], strides = [1, 1]} : vector<8x512xf32> to vector<8x128xf32>
    %54 = arith.negf %53 : vector<8x128xf32>
    %55 = math.exp %54 : vector<8x128xf32>
    %cst_17 = arith.constant 1.000000e+00 : f32
    %56 = vector.broadcast %cst_17 : f32 to vector<8x128xf32>
    %57 = arith.addf %56, %55 : vector<8x128xf32>
    %58 = arith.divf %56, %57 : vector<8x128xf32>
    %59 = arith.mulf %50, %32 : vector<8x128xf32>
    %60 = arith.mulf %44, %52 : vector<8x128xf32>
    %61 = arith.addf %59, %60 : vector<8x128xf32>
    %62 = math.tanh %61 : vector<8x128xf32>
    %63 = arith.mulf %58, %62 : vector<8x128xf32>
    %c2 = arith.constant 2 : index
    %c0_18 = arith.constant 0 : index
    %c0_19 = arith.constant 0 : index
    %64 = vector.load %arg2[%c2, %c0_18, %c0_19] : memref<8x8x512xf32, #tpu.memory_space<vmem>>, vector<1x8x512xf32>
    %65 = vector.shape_cast %64 : vector<1x8x512xf32> to vector<8x512xf32>
    %cst_20 = arith.constant dense<0.000000e+00> : vector<8x512xf32>
    %66 = tpu.matmul %63, %5, %cst_20 {dimension_numbers = #tpu.dot_dimension_numbers<[1], [0], [0], [1], [0, 0, 1, 1], [], []>} : vector<8x128xf32>, vector<128x512xf32>, vector<8x512xf32> -> vector<8x512xf32>
    %67 = arith.addf %65, %66 : vector<8x512xf32>
    %68 = vector.extract_strided_slice %67 {offsets = [0, 0], sizes = [8, 128], strides = [1, 1]} : vector<8x512xf32> to vector<8x128xf32>
    %69 = arith.negf %68 : vector<8x128xf32>
    %70 = math.exp %69 : vector<8x128xf32>
    %cst_21 = arith.constant 1.000000e+00 : f32
    %71 = vector.broadcast %cst_21 : f32 to vector<8x128xf32>
    %72 = arith.addf %71, %70 : vector<8x128xf32>
    %73 = arith.divf %71, %72 : vector<8x128xf32>
    %74 = vector.extract_strided_slice %67 {offsets = [0, 128], sizes = [8, 128], strides = [1, 1]} : vector<8x512xf32> to vector<8x128xf32>
    %75 = arith.negf %74 : vector<8x128xf32>
    %76 = math.exp %75 : vector<8x128xf32>
    %cst_22 = arith.constant 1.000000e+00 : f32
    %77 = vector.broadcast %cst_22 : f32 to vector<8x128xf32>
    %78 = arith.addf %77, %76 : vector<8x128xf32>
    %79 = arith.divf %77, %78 : vector<8x128xf32>
    %80 = vector.extract_strided_slice %67 {offsets = [0, 256], sizes = [8, 128], strides = [1, 1]} : vector<8x512xf32> to vector<8x128xf32>
    %81 = math.tanh %80 : vector<8x128xf32>
    %82 = vector.extract_strided_slice %67 {offsets = [0, 384], sizes = [8, 128], strides = [1, 1]} : vector<8x512xf32> to vector<8x128xf32>
    %83 = arith.negf %82 : vector<8x128xf32>
    %84 = math.exp %83 : vector<8x128xf32>
    %cst_23 = arith.constant 1.000000e+00 : f32
    %85 = vector.broadcast %cst_23 : f32 to vector<8x128xf32>
    %86 = arith.addf %85, %84 : vector<8x128xf32>
    %87 = arith.divf %85, %86 : vector<8x128xf32>
    %88 = arith.mulf %79, %61 : vector<8x128xf32>
    %89 = arith.mulf %73, %81 : vector<8x128xf32>
    %90 = arith.addf %88, %89 : vector<8x128xf32>
    %91 = math.tanh %90 : vector<8x128xf32>
    %92 = arith.mulf %87, %91 : vector<8x128xf32>
    %c3 = arith.constant 3 : index
    %c0_24 = arith.constant 0 : index
    %c0_25 = arith.constant 0 : index
    %93 = vector.load %arg2[%c3, %c0_24, %c0_25] : memref<8x8x512xf32, #tpu.memory_space<vmem>>, vector<1x8x512xf32>
    %94 = vector.shape_cast %93 : vector<1x8x512xf32> to vector<8x512xf32>
    %cst_26 = arith.constant dense<0.000000e+00> : vector<8x512xf32>
    %95 = tpu.matmul %92, %5, %cst_26 {dimension_numbers = #tpu.dot_dimension_numbers<[1], [0], [0], [1], [0, 0, 1, 1], [], []>} : vector<8x128xf32>, vector<128x512xf32>, vector<8x512xf32> -> vector<8x512xf32>
    %96 = arith.addf %94, %95 : vector<8x512xf32>
    %97 = vector.extract_strided_slice %96 {offsets = [0, 0], sizes = [8, 128], strides = [1, 1]} : vector<8x512xf32> to vector<8x128xf32>
    %98 = arith.negf %97 : vector<8x128xf32>
    %99 = math.exp %98 : vector<8x128xf32>
    %cst_27 = arith.constant 1.000000e+00 : f32
    %100 = vector.broadcast %cst_27 : f32 to vector<8x128xf32>
    %101 = arith.addf %100, %99 : vector<8x128xf32>
    %102 = arith.divf %100, %101 : vector<8x128xf32>
    %103 = vector.extract_strided_slice %96 {offsets = [0, 128], sizes = [8, 128], strides = [1, 1]} : vector<8x512xf32> to vector<8x128xf32>
    %104 = arith.negf %103 : vector<8x128xf32>
    %105 = math.exp %104 : vector<8x128xf32>
    %cst_28 = arith.constant 1.000000e+00 : f32
    %106 = vector.broadcast %cst_28 : f32 to vector<8x128xf32>
    %107 = arith.addf %106, %105 : vector<8x128xf32>
    %108 = arith.divf %106, %107 : vector<8x128xf32>
    %109 = vector.extract_strided_slice %96 {offsets = [0, 256], sizes = [8, 128], strides = [1, 1]} : vector<8x512xf32> to vector<8x128xf32>
    %110 = math.tanh %109 : vector<8x128xf32>
    %111 = vector.extract_strided_slice %96 {offsets = [0, 384], sizes = [8, 128], strides = [1, 1]} : vector<8x512xf32> to vector<8x128xf32>
    %112 = arith.negf %111 : vector<8x128xf32>
    %113 = math.exp %112 : vector<8x128xf32>
    %cst_29 = arith.constant 1.000000e+00 : f32
    %114 = vector.broadcast %cst_29 : f32 to vector<8x128xf32>
    %115 = arith.addf %114, %113 : vector<8x128xf32>
    %116 = arith.divf %114, %115 : vector<8x128xf32>
    %117 = arith.mulf %108, %90 : vector<8x128xf32>
    %118 = arith.mulf %102, %110 : vector<8x128xf32>
    %119 = arith.addf %117, %118 : vector<8x128xf32>
    %120 = math.tanh %119 : vector<8x128xf32>
    %121 = arith.mulf %116, %120 : vector<8x128xf32>
    %c4 = arith.constant 4 : index
    %c0_30 = arith.constant 0 : index
    %c0_31 = arith.constant 0 : index
    %122 = vector.load %arg2[%c4, %c0_30, %c0_31] : memref<8x8x512xf32, #tpu.memory_space<vmem>>, vector<1x8x512xf32>
    %123 = vector.shape_cast %122 : vector<1x8x512xf32> to vector<8x512xf32>
    %cst_32 = arith.constant dense<0.000000e+00> : vector<8x512xf32>
    %124 = tpu.matmul %121, %5, %cst_32 {dimension_numbers = #tpu.dot_dimension_numbers<[1], [0], [0], [1], [0, 0, 1, 1], [], []>} : vector<8x128xf32>, vector<128x512xf32>, vector<8x512xf32> -> vector<8x512xf32>
    %125 = arith.addf %123, %124 : vector<8x512xf32>
    %126 = vector.extract_strided_slice %125 {offsets = [0, 0], sizes = [8, 128], strides = [1, 1]} : vector<8x512xf32> to vector<8x128xf32>
    %127 = arith.negf %126 : vector<8x128xf32>
    %128 = math.exp %127 : vector<8x128xf32>
    %cst_33 = arith.constant 1.000000e+00 : f32
    %129 = vector.broadcast %cst_33 : f32 to vector<8x128xf32>
    %130 = arith.addf %129, %128 : vector<8x128xf32>
    %131 = arith.divf %129, %130 : vector<8x128xf32>
    %132 = vector.extract_strided_slice %125 {offsets = [0, 128], sizes = [8, 128], strides = [1, 1]} : vector<8x512xf32> to vector<8x128xf32>
    %133 = arith.negf %132 : vector<8x128xf32>
    %134 = math.exp %133 : vector<8x128xf32>
    %cst_34 = arith.constant 1.000000e+00 : f32
    %135 = vector.broadcast %cst_34 : f32 to vector<8x128xf32>
    %136 = arith.addf %135, %134 : vector<8x128xf32>
    %137 = arith.divf %135, %136 : vector<8x128xf32>
    %138 = vector.extract_strided_slice %125 {offsets = [0, 256], sizes = [8, 128], strides = [1, 1]} : vector<8x512xf32> to vector<8x128xf32>
    %139 = math.tanh %138 : vector<8x128xf32>
    %140 = vector.extract_strided_slice %125 {offsets = [0, 384], sizes = [8, 128], strides = [1, 1]} : vector<8x512xf32> to vector<8x128xf32>
    %141 = arith.negf %140 : vector<8x128xf32>
    %142 = math.exp %141 : vector<8x128xf32>
    %cst_35 = arith.constant 1.000000e+00 : f32
    %143 = vector.broadcast %cst_35 : f32 to vector<8x128xf32>
    %144 = arith.addf %143, %142 : vector<8x128xf32>
    %145 = arith.divf %143, %144 : vector<8x128xf32>
    %146 = arith.mulf %137, %119 : vector<8x128xf32>
    %147 = arith.mulf %131, %139 : vector<8x128xf32>
    %148 = arith.addf %146, %147 : vector<8x128xf32>
    %149 = math.tanh %148 : vector<8x128xf32>
    %150 = arith.mulf %145, %149 : vector<8x128xf32>
    %c5 = arith.constant 5 : index
    %c0_36 = arith.constant 0 : index
    %c0_37 = arith.constant 0 : index
    %151 = vector.load %arg2[%c5, %c0_36, %c0_37] : memref<8x8x512xf32, #tpu.memory_space<vmem>>, vector<1x8x512xf32>
    %152 = vector.shape_cast %151 : vector<1x8x512xf32> to vector<8x512xf32>
    %cst_38 = arith.constant dense<0.000000e+00> : vector<8x512xf32>
    %153 = tpu.matmul %150, %5, %cst_38 {dimension_numbers = #tpu.dot_dimension_numbers<[1], [0], [0], [1], [0, 0, 1, 1], [], []>} : vector<8x128xf32>, vector<128x512xf32>, vector<8x512xf32> -> vector<8x512xf32>
    %154 = arith.addf %152, %153 : vector<8x512xf32>
    %155 = vector.extract_strided_slice %154 {offsets = [0, 0], sizes = [8, 128], strides = [1, 1]} : vector<8x512xf32> to vector<8x128xf32>
    %156 = arith.negf %155 : vector<8x128xf32>
    %157 = math.exp %156 : vector<8x128xf32>
    %cst_39 = arith.constant 1.000000e+00 : f32
    %158 = vector.broadcast %cst_39 : f32 to vector<8x128xf32>
    %159 = arith.addf %158, %157 : vector<8x128xf32>
    %160 = arith.divf %158, %159 : vector<8x128xf32>
    %161 = vector.extract_strided_slice %154 {offsets = [0, 128], sizes = [8, 128], strides = [1, 1]} : vector<8x512xf32> to vector<8x128xf32>
    %162 = arith.negf %161 : vector<8x128xf32>
    %163 = math.exp %162 : vector<8x128xf32>
    %cst_40 = arith.constant 1.000000e+00 : f32
    %164 = vector.broadcast %cst_40 : f32 to vector<8x128xf32>
    %165 = arith.addf %164, %163 : vector<8x128xf32>
    %166 = arith.divf %164, %165 : vector<8x128xf32>
    %167 = vector.extract_strided_slice %154 {offsets = [0, 256], sizes = [8, 128], strides = [1, 1]} : vector<8x512xf32> to vector<8x128xf32>
    %168 = math.tanh %167 : vector<8x128xf32>
    %169 = vector.extract_strided_slice %154 {offsets = [0, 384], sizes = [8, 128], strides = [1, 1]} : vector<8x512xf32> to vector<8x128xf32>
    %170 = arith.negf %169 : vector<8x128xf32>
    %171 = math.exp %170 : vector<8x128xf32>
    %cst_41 = arith.constant 1.000000e+00 : f32
    %172 = vector.broadcast %cst_41 : f32 to vector<8x128xf32>
    %173 = arith.addf %172, %171 : vector<8x128xf32>
    %174 = arith.divf %172, %173 : vector<8x128xf32>
    %175 = arith.mulf %166, %148 : vector<8x128xf32>
    %176 = arith.mulf %160, %168 : vector<8x128xf32>
    %177 = arith.addf %175, %176 : vector<8x128xf32>
    %178 = math.tanh %177 : vector<8x128xf32>
    %179 = arith.mulf %174, %178 : vector<8x128xf32>
    %c6 = arith.constant 6 : index
    %c0_42 = arith.constant 0 : index
    %c0_43 = arith.constant 0 : index
    %180 = vector.load %arg2[%c6, %c0_42, %c0_43] : memref<8x8x512xf32, #tpu.memory_space<vmem>>, vector<1x8x512xf32>
    %181 = vector.shape_cast %180 : vector<1x8x512xf32> to vector<8x512xf32>
    %cst_44 = arith.constant dense<0.000000e+00> : vector<8x512xf32>
    %182 = tpu.matmul %179, %5, %cst_44 {dimension_numbers = #tpu.dot_dimension_numbers<[1], [0], [0], [1], [0, 0, 1, 1], [], []>} : vector<8x128xf32>, vector<128x512xf32>, vector<8x512xf32> -> vector<8x512xf32>
    %183 = arith.addf %181, %182 : vector<8x512xf32>
    %184 = vector.extract_strided_slice %183 {offsets = [0, 0], sizes = [8, 128], strides = [1, 1]} : vector<8x512xf32> to vector<8x128xf32>
    %185 = arith.negf %184 : vector<8x128xf32>
    %186 = math.exp %185 : vector<8x128xf32>
    %cst_45 = arith.constant 1.000000e+00 : f32
    %187 = vector.broadcast %cst_45 : f32 to vector<8x128xf32>
    %188 = arith.addf %187, %186 : vector<8x128xf32>
    %189 = arith.divf %187, %188 : vector<8x128xf32>
    %190 = vector.extract_strided_slice %183 {offsets = [0, 128], sizes = [8, 128], strides = [1, 1]} : vector<8x512xf32> to vector<8x128xf32>
    %191 = arith.negf %190 : vector<8x128xf32>
    %192 = math.exp %191 : vector<8x128xf32>
    %cst_46 = arith.constant 1.000000e+00 : f32
    %193 = vector.broadcast %cst_46 : f32 to vector<8x128xf32>
    %194 = arith.addf %193, %192 : vector<8x128xf32>
    %195 = arith.divf %193, %194 : vector<8x128xf32>
    %196 = vector.extract_strided_slice %183 {offsets = [0, 256], sizes = [8, 128], strides = [1, 1]} : vector<8x512xf32> to vector<8x128xf32>
    %197 = math.tanh %196 : vector<8x128xf32>
    %198 = vector.extract_strided_slice %183 {offsets = [0, 384], sizes = [8, 128], strides = [1, 1]} : vector<8x512xf32> to vector<8x128xf32>
    %199 = arith.negf %198 : vector<8x128xf32>
    %200 = math.exp %199 : vector<8x128xf32>
    %cst_47 = arith.constant 1.000000e+00 : f32
    %201 = vector.broadcast %cst_47 : f32 to vector<8x128xf32>
    %202 = arith.addf %201, %200 : vector<8x128xf32>
    %203 = arith.divf %201, %202 : vector<8x128xf32>
    %204 = arith.mulf %195, %177 : vector<8x128xf32>
    %205 = arith.mulf %189, %197 : vector<8x128xf32>
    %206 = arith.addf %204, %205 : vector<8x128xf32>
    %207 = math.tanh %206 : vector<8x128xf32>
    %208 = arith.mulf %203, %207 : vector<8x128xf32>
    %c7 = arith.constant 7 : index
    %c0_48 = arith.constant 0 : index
    %c0_49 = arith.constant 0 : index
    %209 = vector.load %arg2[%c7, %c0_48, %c0_49] : memref<8x8x512xf32, #tpu.memory_space<vmem>>, vector<1x8x512xf32>
    %210 = vector.shape_cast %209 : vector<1x8x512xf32> to vector<8x512xf32>
    %cst_50 = arith.constant dense<0.000000e+00> : vector<8x512xf32>
    %211 = tpu.matmul %208, %5, %cst_50 {dimension_numbers = #tpu.dot_dimension_numbers<[1], [0], [0], [1], [0, 0, 1, 1], [], []>} : vector<8x128xf32>, vector<128x512xf32>, vector<8x512xf32> -> vector<8x512xf32>
    %212 = arith.addf %210, %211 : vector<8x512xf32>
    %213 = vector.extract_strided_slice %212 {offsets = [0, 0], sizes = [8, 128], strides = [1, 1]} : vector<8x512xf32> to vector<8x128xf32>
    %214 = arith.negf %213 : vector<8x128xf32>
    %215 = math.exp %214 : vector<8x128xf32>
    %cst_51 = arith.constant 1.000000e+00 : f32
    %216 = vector.broadcast %cst_51 : f32 to vector<8x128xf32>
    %217 = arith.addf %216, %215 : vector<8x128xf32>
    %218 = arith.divf %216, %217 : vector<8x128xf32>
    %219 = vector.extract_strided_slice %212 {offsets = [0, 128], sizes = [8, 128], strides = [1, 1]} : vector<8x512xf32> to vector<8x128xf32>
    %220 = arith.negf %219 : vector<8x128xf32>
    %221 = math.exp %220 : vector<8x128xf32>
    %cst_52 = arith.constant 1.000000e+00 : f32
    %222 = vector.broadcast %cst_52 : f32 to vector<8x128xf32>
    %223 = arith.addf %222, %221 : vector<8x128xf32>
    %224 = arith.divf %222, %223 : vector<8x128xf32>
    %225 = vector.extract_strided_slice %212 {offsets = [0, 256], sizes = [8, 128], strides = [1, 1]} : vector<8x512xf32> to vector<8x128xf32>
    %226 = math.tanh %225 : vector<8x128xf32>
    %227 = vector.extract_strided_slice %212 {offsets = [0, 384], sizes = [8, 128], strides = [1, 1]} : vector<8x512xf32> to vector<8x128xf32>
    %228 = arith.negf %227 : vector<8x128xf32>
    %229 = math.exp %228 : vector<8x128xf32>
    %cst_53 = arith.constant 1.000000e+00 : f32
    %230 = vector.broadcast %cst_53 : f32 to vector<8x128xf32>
    %231 = arith.addf %230, %229 : vector<8x128xf32>
    %232 = arith.divf %230, %231 : vector<8x128xf32>
    %233 = arith.mulf %224, %206 : vector<8x128xf32>
    %234 = arith.mulf %218, %226 : vector<8x128xf32>
    %235 = arith.addf %233, %234 : vector<8x128xf32>
    %236 = math.tanh %235 : vector<8x128xf32>
    %237 = arith.mulf %232, %236 : vector<8x128xf32>
    %c0_54 = arith.constant 0 : index
    %c0_55 = arith.constant 0 : index
    %238 = vector.load %arg5[%c0_54, %c0_55] : memref<8x128xf32, #tpu.memory_space<vmem>>, vector<8x128xf32>
    tpu.vector_store %arg5[%c0_54, %c0_55], %237 {strides = array<i32>} : memref<8x128xf32, #tpu.memory_space<vmem>>, vector<8x128xf32>,
    %c0_56 = arith.constant 0 : index
    %c0_57 = arith.constant 0 : index
    %239 = vector.load %arg6[%c0_56, %c0_57] : memref<8x128xf32, #tpu.memory_space<vmem>>, vector<8x128xf32>
    tpu.vector_store %arg6[%c0_56, %c0_57], %235 {strides = array<i32>} : memref<8x128xf32, #tpu.memory_space<vmem>>, vector<8x128xf32>,
    %c0_i32_58 = arith.constant 0 : i32
    %240 = arith.cmpi eq, %arg1, %c0_i32_58 : i32
    %241 = arith.extui %240 : i1 to i32
    %c0_i32_59 = arith.constant 0 : i32
    %242 = arith.cmpi ne, %241, %c0_i32_59 : i32
    scf.if %242 {
      %c0_60 = arith.constant 0 : index
      %c0_61 = arith.constant 0 : index
      %243 = vector.load %arg4[%c0_60, %c0_61] : memref<8x128xf32, #tpu.memory_space<vmem>>, vector<8x128xf32>
      tpu.vector_store %arg4[%c0_60, %c0_61], %237 {strides = array<i32>} : memref<8x128xf32, #tpu.memory_space<vmem>>, vector<8x128xf32>,
    } else {
    }
    return
  }
  func.func @transform_0(%arg0: i32, %arg1: i32) -> (i32, i32, i32) {
    %c0_i32 = arith.constant 0 : i32
    %c0_i32_0 = arith.constant 0 : i32
    return %arg1, %arg0, %c0_i32 : i32, i32, i32
  }
  func.func @transform_1(%arg0: i32, %arg1: i32) -> (i32, i32) {
    %c0_i32 = arith.constant 0 : i32
    %c0_i32_0 = arith.constant 0 : i32
    %c0_i32_1 = arith.constant 0 : i32
    return %c0_i32, %c0_i32_0 : i32, i32
  }
  func.func @transform_2(%arg0: i32, %arg1: i32) -> (i32, i32) {
    %c0_i32 = arith.constant 0 : i32
    %c0_i32_0 = arith.constant 0 : i32
    return %arg0, %c0_i32 : i32, i32
  }
}

</mosaic_0001>

<llo_original>
// kernel: tpu_custom_call.1
$region0: #{tpu_custom_call.1}
  #allocation0 [shape = 'u32[]', space=smem, size = 0x4, offset = 0x4, fixed_abs, tag = 'smem constant byte address 0x4 - core index']
  #allocation1 [shape = 'u32[72,128]{1,0:T(1,128)}', space=vmem, size = 0x9000, scoped, tag = 'internal scratch']
  #allocation2 [shape = 'f32[8,128]{1,0:T(8,128)}', space=vmem, size = 0x1000, scoped, tag = 'scratch operand']
  #allocation3 [shape = 'f32[8,128]{1,0:T(8,128)}', space=vmem, size = 0x1000, scoped, tag = 'scratch operand']
  %s0 = inlined_call_operand.hbm [shape: f32[8,8,512], index: 0, kind: input, shape index: {}]
  %s1 = inlined_call_operand.hbm [shape: f32[128,512], index: 1, kind: input, shape index: {}]
  %s2 = inlined_call_operand.hbm [shape: f32[8,128], index: 2, kind: output, shape index: {}]
  %s3 = sld [smem:[#allocation0]]
  $region34: #{tpu_custom_call.1} parent=0
    _
  %s5 = ssub.s32 1, %s3
  %s6 = scalar_select 0, %s5, %s3
  $region1: #{tpu_custom_call.1} parent=0
    #allocation4 [shape = 'u8[131072]{0}', space=vmem, size = 0x20000, scoped, tag = 'input window, operand 0, single buffered']
    #allocation5 [shape = 's32[1]{0}', space=sflag, size = 0x4, scoped, tag = 'scoped memory for tpu_custom_call.1']
    #allocation6 [shape = 's32[1]{0}', space=sflag, size = 0x4, scoped, tag = 'scoped memory for tpu_custom_call.1']
    #allocation7 [shape = 'u8[262144]{0}', space=vmem, size = 0x40000, scoped, tag = 'input window, operand 1, single buffered']
    #allocation8 [shape = 's32[1]{0}', space=sflag, size = 0x4, scoped, tag = 'scoped memory for tpu_custom_call.1']
    #allocation9 [shape = 'u8[4096]{0}', space=vmem, size = 0x1000, scoped, tag = 'output window, operand 0, single buffered']
    %7 = vsyncpa [#allocation5], 0
    %8 = vsyncpa [#allocation8], 0
    %9 = vsyncpa [#allocation6], 0
    // Predicated region
    $region2: #{tpu_custom_call.1} parent=1 // pred_check
      _
    $region3: #{tpu_custom_call.1} parent=1 // pred_check_branch
      %11 = sbr.rel (0) target = $region5
    $region4: #{tpu_custom_call.1} parent=1 // pred_region
      %13 = vsyncadd [#allocation5], 0
      %s14 = sshll.u32 %s0, 4
      %s15 = int_to_ptr.hbm [resolvable:$true] %s14
      %s16 = sshll.u32 [#allocation4], 4
      %s17 = int_to_ptr.vmem [resolvable:$true] %s16
      %22 = dma.hbm_to_vmem [thread:$0]  %s15, 4096, %s17, [#allocation5], 512, 512, 32
    $region5: #{tpu_custom_call.1} parent=1 // pred_fallthru
      _
    // Predicated region
    $region6: #{tpu_custom_call.1} parent=1 // pred_check
      _
    $region7: #{tpu_custom_call.1} parent=1 // pred_check_branch
      %24 = sbr.rel (0) target = $region9
    $region8: #{tpu_custom_call.1} parent=1 // pred_region
      %26 = vsyncadd [#allocation8], 0
      %s27 = sshll.u32 %s1, 4
      %s28 = int_to_ptr.hbm [resolvable:$true] %s27
      %s29 = sshll.u32 [#allocation7], 4
      %s30 = int_to_ptr.vmem [resolvable:$true] %s29
      %35 = dma.hbm_to_vmem [thread:$0]  %s28, 8192, %s30, [#allocation8], 512, 512, 32
    $region9: #{tpu_custom_call.1} parent=1 // pred_fallthru
      _
    // Predicated region
    $region10: #{tpu_custom_call.1} parent=1 // pred_check
      _
    $region11: #{tpu_custom_call.1} parent=1 // pred_check_branch
      %37 = sbr.rel (0) target = $region13
    $region12: #{tpu_custom_call.1} parent=1 // pred_region
      %39 = dma.done [#allocation5], 4096
    $region13: #{tpu_custom_call.1} parent=1 // pred_fallthru
      _
    // Predicated region
    $region14: #{tpu_custom_call.1} parent=1 // pred_check
      _
    $region15: #{tpu_custom_call.1} parent=1 // pred_check_branch
      %41 = sbr.rel (0) target = $region17
    $region16: #{tpu_custom_call.1} parent=1 // pred_region
      %43 = dma.done [#allocation8], 8192
    $region17: #{tpu_custom_call.1} parent=1 // pred_fallthru
      _
    %p44 = scmp.eq.s32.totalorder 0, 0
    // Predicated region
    $region18: #{tpu_custom_call.1} parent=1 // pred_check
      %p45 = pneg %p44
    $region19: #{tpu_custom_call.1} parent=1 // pred_check_branch
      %47 = sbr.rel (%p45) target = $region21
    $region20: #{tpu_custom_call.1} parent=1 // pred_region
      %48 = vst [vmem:[#allocation2] sm:$0xff] 0.0
      %49 = vst [vmem:[#allocation3] sm:$0xff] 0.0
    $region21: #{tpu_custom_call.1} parent=1 // pred_fallthru
      _
    %v50 = vld [vmem:[#allocation2] sm:$0xff]
    %v51 = vld [vmem:[#allocation3] sm:$0xff]
    %v52 = vld [vmem:[#allocation7] sm:$0xff]
    %v53 = vld [vmem:[#allocation7 + $0x8] sm:$0xff]
    %v54 = vld [vmem:[#allocation7 + $0x10] sm:$0xff]
    %v55 = vld [vmem:[#allocation7 + $0x18] sm:$0xff]
    %v56 = vld [vmem:[#allocation7 + $0x20] sm:$0xff]
    %v57 = vld [vmem:[#allocation7 + $0x28] sm:$0xff]
    %v58 = vld [vmem:[#allocation7 + $0x30] sm:$0xff]
    %v59 = vld [vmem:[#allocation7 + $0x38] sm:$0xff]
    %v60 = vld [vmem:[#allocation7 + $0x40] sm:$0xff]
    %v61 = vld [vmem:[#allocation7 + $0x48] sm:$0xff]
    %v62 = vld [vmem:[#allocation7 + $0x50] sm:$0xff]
    %v63 = vld [vmem:[#allocation7 + $0x58] sm:$0xff]
    %v64 = vld [vmem:[#allocation7 + $0x60] sm:$0xff]
    %v65 = vld [vmem:[#allocation7 + $0x68] sm:$0xff]
    %v66 = vld [vmem:[#allocation7 + $0x70] sm:$0xff]
    %v67 = vld [vmem:[#allocation7 + $0x78] sm:$0xff]
    %v68 = vld [vmem:[#allocation7 + $0x80] sm:$0xff]
    %v69 = vld [vmem:[#allocation7 + $0x88] sm:$0xff]
    %v70 = vld [vmem:[#allocation7 + $0x90] sm:$0xff]
    %v71 = vld [vmem:[#allocation7 + $0x98] sm:$0xff]
    %v72 = vld [vmem:[#allocation7 + $0xa0] sm:$0xff]
    %v73 = vld [vmem:[#allocation7 + $0xa8] sm:$0xff]
    %v74 = vld [vmem:[#allocation7 + $0xb0] sm:$0xff]
    %v75 = vld [vmem:[#allocation7 + $0xb8] sm:$0xff]
    %v76 = vld [vmem:[#allocation7 + $0xc0] sm:$0xff]
    %v77 = vld [vmem:[#allocation7 + $0xc8] sm:$0xff]
    %v78 = vld [vmem:[#allocation7 + $0xd0] sm:$0xff]
    %v79 = vld [vmem:[#allocation7 + $0xd8] sm:$0xff]
    %v80 = vld [vmem:[#allocation7 + $0xe0] sm:$0xff]
    %v81 = vld [vmem:[#allocation7 + $0xe8] sm:$0xff]
    %v82 = vld [vmem:[#allocation7 + $0xf0] sm:$0xff]
    %v83 = vld [vmem:[#allocation7 + $0xf8] sm:$0xff]
    %v84 = vld [vmem:[#allocation7 + $0x100] sm:$0xff]
    %v85 = vld [vmem:[#allocation7 + $0x108] sm:$0xff]
    %v86 = vld [vmem:[#allocation7 + $0x110] sm:$0xff]
    %v87 = vld [vmem:[#allocation7 + $0x118] sm:$0xff]
    %v88 = vld [vmem:[#allocation7 + $0x120] sm:$0xff]
    %v89 = vld [vmem:[#allocation7 + $0x128] sm:$0xff]
    %v90 = vld [vmem:[#allocation7 + $0x130] sm:$0xff]
    %v91 = vld [vmem:[#allocation7 + $0x138] sm:$0xff]
    %v92 = vld [vmem:[#allocation7 + $0x140] sm:$0xff]
    %v93 = vld [vmem:[#allocation7 + $0x148] sm:$0xff]
    %v94 = vld [vmem:[#allocation7 + $0x150] sm:$0xff]
    %v95 = vld [vmem:[#allocation7 + $0x158] sm:$0xff]
    %v96 = vld [vmem:[#allocation7 + $0x160] sm:$0xff]
    %v97 = vld [vmem:[#allocation7 + $0x168] sm:$0xff]
    %v98 = vld [vmem:[#allocation7 + $0x170] sm:$0xff]
    %v99 = vld [vmem:[#allocation7 + $0x178] sm:$0xff]
    %v100 = vld [vmem:[#allocation7 + $0x180] sm:$0xff]
    %v101 = vld [vmem:[#allocation7 + $0x188] sm:$0xff]
    %v102 = vld [vmem:[#allocation7 + $0x190] sm:$0xff]
    %v103 = vld [vmem:[#allocation7 + $0x198] sm:$0xff]
    %v104 = vld [vmem:[#allocation7 + $0x1a0] sm:$0xff]
    %v105 = vld [vmem:[#allocation7 + $0x1a8] sm:$0xff]
    %v106 = vld [vmem:[#allocation7 + $0x1b0] sm:$0xff]
    %v107 = vld [vmem:[#allocation7 + $0x1b8] sm:$0xff]
    %v108 = vld [vmem:[#allocation7 + $0x1c0] sm:$0xff]
    %v109 = vld [vmem:[#allocation7 + $0x1c8] sm:$0xff]
    %v110 = vld [vmem:[#allocation7 + $0x1d0] sm:$0xff]
    %v111 = vld [vmem:[#allocation7 + $0x1d8] sm:$0xff]
    %v112 = vld [vmem:[#allocation7 + $0x1e0] sm:$0xff]
    %v113 = vld [vmem:[#allocation7 + $0x1e8] sm:$0xff]
    %v114 = vld [vmem:[#allocation7 + $0x1f0] sm:$0xff]
    %v115 = vld [vmem:[#allocation7 + $0x1f8] sm:$0xff]
    %v116 = vld [vmem:[#allocation4] sm:$0xff]
    %v117 = vld [vmem:[#allocation4 + $0x8] sm:$0xff]
    %v118 = vld [vmem:[#allocation4 + $0x10] sm:$0xff]
    %v119 = vld [vmem:[#allocation4 + $0x18] sm:$0xff]
    %120 = vmatpush.msra.mxu0 %v112
    %121 = vmatpush.msra.mxu0 %v108
    %122 = vmatpush.msra.mxu0 %v104
    %123 = vmatpush.msra.mxu0 %v100
    %124 = vmatpush.msra.mxu0 %v96
    %125 = vmatpush.msra.mxu0 %v92
    %126 = vmatpush.msra.mxu0 %v88
    %127 = vmatpush.msra.mxu0 %v84
    %128 = vmatpush.msra.mxu0 %v80
    %129 = vmatpush.msra.mxu0 %v76
    %130 = vmatpush.msra.mxu0 %v72
    %131 = vmatpush.msra.mxu0 %v68
    %132 = vmatpush.msra.mxu0 %v64
    %133 = vmatpush.msra.mxu0 %v60
    %134 = vmatpush.msra.mxu0 %v56
    %135 = vmatpush.msra.mxu0 %v52
    %136 = vmatmul.f32.gmra.mxu0 %v50
    %v137 = vpop.f32.mrf.mxu0
    %v138 = vadd.f32 0.0, %v137
    %139 = vdwg.mxu0
    %140 = vmatpush.msra.mxu0 %v113
    %141 = vmatpush.msra.mxu0 %v109
    %142 = vmatpush.msra.mxu0 %v105
    %143 = vmatpush.msra.mxu0 %v101
    %144 = vmatpush.msra.mxu0 %v97
    %145 = vmatpush.msra.mxu0 %v93
    %146 = vmatpush.msra.mxu0 %v89
    %147 = vmatpush.msra.mxu0 %v85
    %148 = vmatpush.msra.mxu0 %v81
    %149 = vmatpush.msra.mxu0 %v77
    %150 = vmatpush.msra.mxu0 %v73
    %151 = vmatpush.msra.mxu0 %v69
    %152 = vmatpush.msra.mxu0 %v65
    %153 = vmatpush.msra.mxu0 %v61
    %154 = vmatpush.msra.mxu0 %v57
    %155 = vmatpush.msra.mxu0 %v53
    %156 = vmatmul.f32.gmra.mxu0 %v50
    %v157 = vpop.f32.mrf.mxu0
    %v158 = vadd.f32 0.0, %v157
    %159 = vdwg.mxu0
    %160 = vmatpush.msra.mxu0 %v114
    %161 = vmatpush.msra.mxu0 %v110
    %162 = vmatpush.msra.mxu0 %v106
    %163 = vmatpush.msra.mxu0 %v102
    %164 = vmatpush.msra.mxu0 %v98
    %165 = vmatpush.msra.mxu0 %v94
    %166 = vmatpush.msra.mxu0 %v90
    %167 = vmatpush.msra.mxu0 %v86
    %168 = vmatpush.msra.mxu0 %v82
    %169 = vmatpush.msra.mxu0 %v78
    %170 = vmatpush.msra.mxu0 %v74
    %171 = vmatpush.msra.mxu0 %v70
    %172 = vmatpush.msra.mxu0 %v66
    %173 = vmatpush.msra.mxu0 %v62
    %174 = vmatpush.msra.mxu0 %v58
    %175 = vmatpush.msra.mxu0 %v54
    %176 = vmatmul.f32.gmra.mxu0 %v50
    %v177 = vpop.f32.mrf.mxu0
    %v178 = vadd.f32 0.0, %v177
    %179 = vdwg.mxu0
    %180 = vmatpush.msra.mxu0 %v115
    %181 = vmatpush.msra.mxu0 %v111
    %182 = vmatpush.msra.mxu0 %v107
    %183 = vmatpush.msra.mxu0 %v103
    %184 = vmatpush.msra.mxu0 %v99
    %185 = vmatpush.msra.mxu0 %v95
    %186 = vmatpush.msra.mxu0 %v91
    %187 = vmatpush.msra.mxu0 %v87
    %188 = vmatpush.msra.mxu0 %v83
    %189 = vmatpush.msra.mxu0 %v79
    %190 = vmatpush.msra.mxu0 %v75
    %191 = vmatpush.msra.mxu0 %v71
    %192 = vmatpush.msra.mxu0 %v67
    %193 = vmatpush.msra.mxu0 %v63
    %194 = vmatpush.msra.mxu0 %v59
    %195 = vmatpush.msra.mxu0 %v55
    %196 = vmatmul.f32.gmra.mxu0 %v50
    %v197 = vpop.f32.mrf.mxu0
    %v198 = vadd.f32 0.0, %v197
    %199 = vdwg.mxu0
    %v200 = vadd.f32 %v116, %v138
    %v201 = vadd.f32 %v117, %v158
    %v202 = vadd.f32 %v118, %v178
    %v203 = vadd.f32 %v119, %v198
    %v204 = vxor.u32 %v200, 2147483648
    %v205 = vmul.f32 %v204, 1.442695
    %v206 = vpow.pop %v205
    %v207 = vadd.f32 %v206, 1.0
    %v208 = vrcp.pop %v207
    %v209 = vmul.f32 %v207, %v208
    %v210 = vsub.f32 1.0, %v209
    %v211 = vmul.f32 %v208, %v210
    %v212 = vadd.f32 %v208, %v211
    %vm213 = vweird.f32 %v207
    %vm214 = vweird.f32 %v208
    %vm215 = vmor %vm213, %vm214
    %v216 = vsel %vm215, %v208, %v212
    %v217 = vand.u32 2147483647, %v207
    %vm218 = vcmp.eq.f32.partialorder %v217, 8.507059e+37
    %v219 = vand.u32 %v207, 2147483648
    %v220 = vor.u32 1.1754944e-38, %v219
    %v221 = vsel %vm218, %v220, %v216
    %v222 = vmul.f32 1.0, %v221
    %v223 = vxor.u32 %v201, 2147483648
    %v224 = vmul.f32 %v223, 1.442695
    %v225 = vpow.pop %v224
    %v226 = vadd.f32 %v225, 1.0
    %v227 = vrcp.pop %v226
    %v228 = vmul.f32 %v226, %v227
    %v229 = vsub.f32 1.0, %v228
    %v230 = vmul.f32 %v227, %v229
    %v231 = vadd.f32 %v227, %v230
    %vm232 = vweird.f32 %v226
    %vm233 = vweird.f32 %v227
    %vm234 = vmor %vm232, %vm233
    %v235 = vsel %vm234, %v227, %v231
    %v236 = vand.u32 2147483647, %v226
    %vm237 = vcmp.eq.f32.partialorder %v236, 8.507059e+37
    %v238 = vand.u32 %v226, 2147483648
    %v239 = vor.u32 1.1754944e-38, %v238
    %v240 = vsel %vm237, %v239, %v235
    %v241 = vmul.f32 1.0, %v240
    %v242 = vtanh.pop %v202
    %v243 = vxor.u32 %v203, 2147483648
    %v244 = vmul.f32 %v243, 1.442695
    %v245 = vpow.pop %v244
    %v246 = vadd.f32 %v245, 1.0
    %v247 = vrcp.pop %v246
    %v248 = vmul.f32 %v246, %v247
    %v249 = vsub.f32 1.0, %v248
    %v250 = vmul.f32 %v247, %v249
    %v251 = vadd.f32 %v247, %v250
    %vm252 = vweird.f32 %v246
    %vm253 = vweird.f32 %v247
    %vm254 = vmor %vm252, %vm253
    %v255 = vsel %vm254, %v247, %v251
    %v256 = vand.u32 2147483647, %v246
    %vm257 = vcmp.eq.f32.partialorder %v256, 8.507059e+37
    %v258 = vand.u32 %v246, 2147483648
    %v259 = vor.u32 1.1754944e-38, %v258
    %v260 = vsel %vm257, %v259, %v255
    %v261 = vmul.f32 1.0, %v260
    %v262 = vmul.f32 %v241, %v51
    %v263 = vmul.f32 %v222, %v242
    %v264 = vadd.f32 %v262, %v263
    %v265 = vtanh.pop %v264
    %v266 = vmul.f32 %v261, %v265
    %s267 = scalar_lea.vmem [#allocation4], 32
    %v268 = vld [vmem:[%s267] sm:$0xff]
    %v269 = vld [vmem:[%s267 + $0x8] sm:$0xff]
    %v270 = vld [vmem:[%s267 + $0x10] sm:$0xff]
    %v271 = vld [vmem:[%s267 + $0x18] sm:$0xff]
    %272 = vmatpush.msra.mxu0 %v112
    %273 = vmatpush.msra.mxu0 %v108
    %274 = vmatpush.msra.mxu0 %v104
    %275 = vmatpush.msra.mxu0 %v100
    %276 = vmatpush.msra.mxu0 %v96
    %277 = vmatpush.msra.mxu0 %v92
    %278 = vmatpush.msra.mxu0 %v88
    %279 = vmatpush.msra.mxu0 %v84
    %280 = vmatpush.msra.mxu0 %v80
    %281 = vmatpush.msra.mxu0 %v76
    %282 = vmatpush.msra.mxu0 %v72
    %283 = vmatpush.msra.mxu0 %v68
    %284 = vmatpush.msra.mxu0 %v64
    %285 = vmatpush.msra.mxu0 %v60
    %286 = vmatpush.msra.mxu0 %v56
    %287 = vmatpush.msra.mxu0 %v52
    %288 = vmatmul.f32.gmra.mxu0 %v266
    %v289 = vpop.f32.mrf.mxu0
    %v290 = vadd.f32 0.0, %v289
    %291 = vdwg.mxu0
    %292 = vmatpush.msra.mxu0 %v113
    %293 = vmatpush.msra.mxu0 %v109
    %294 = vmatpush.msra.mxu0 %v105
    %295 = vmatpush.msra.mxu0 %v101
    %296 = vmatpush.msra.mxu0 %v97
    %297 = vmatpush.msra.mxu0 %v93
    %298 = vmatpush.msra.mxu0 %v89
    %299 = vmatpush.msra.mxu0 %v85
    %300 = vmatpush.msra.mxu0 %v81
    %301 = vmatpush.msra.mxu0 %v77
    %302 = vmatpush.msra.mxu0 %v73
    %303 = vmatpush.msra.mxu0 %v69
    %304 = vmatpush.msra.mxu0 %v65
    %305 = vmatpush.msra.mxu0 %v61
    %306 = vmatpush.msra.mxu0 %v57
    %307 = vmatpush.msra.mxu0 %v53
    %308 = vmatmul.f32.gmra.mxu0 %v266
    %v309 = vpop.f32.mrf.mxu0
    %v310 = vadd.f32 0.0, %v309
    %311 = vdwg.mxu0
    %312 = vmatpush.msra.mxu0 %v114
    %313 = vmatpush.msra.mxu0 %v110
    %314 = vmatpush.msra.mxu0 %v106
    %315 = vmatpush.msra.mxu0 %v102
    %316 = vmatpush.msra.mxu0 %v98
    %317 = vmatpush.msra.mxu0 %v94
    %318 = vmatpush.msra.mxu0 %v90
    %319 = vmatpush.msra.mxu0 %v86
    %320 = vmatpush.msra.mxu0 %v82
    %321 = vmatpush.msra.mxu0 %v78
    %322 = vmatpush.msra.mxu0 %v74
    %323 = vmatpush.msra.mxu0 %v70
    %324 = vmatpush.msra.mxu0 %v66
    %325 = vmatpush.msra.mxu0 %v62
    %326 = vmatpush.msra.mxu0 %v58
    %327 = vmatpush.msra.mxu0 %v54
    %328 = vmatmul.f32.gmra.mxu0 %v266
    %v329 = vpop.f32.mrf.mxu0
    %v330 = vadd.f32 0.0, %v329
    %331 = vdwg.mxu0
    %332 = vmatpush.msra.mxu0 %v115
    %333 = vmatpush.msra.mxu0 %v111
    %334 = vmatpush.msra.mxu0 %v107
    %335 = vmatpush.msra.mxu0 %v103
    %336 = vmatpush.msra.mxu0 %v99
    %337 = vmatpush.msra.mxu0 %v95
    %338 = vmatpush.msra.mxu0 %v91
    %339 = vmatpush.msra.mxu0 %v87
    %340 = vmatpush.msra.mxu0 %v83
    %341 = vmatpush.msra.mxu0 %v79
    %342 = vmatpush.msra.mxu0 %v75
    %343 = vmatpush.msra.mxu0 %v71
    %344 = vmatpush.msra.mxu0 %v67
    %345 = vmatpush.msra.mxu0 %v63
    %346 = vmatpush.msra.mxu0 %v59
    %347 = vmatpush.msra.mxu0 %v55
    %348 = vmatmul.f32.gmra.mxu0 %v266
    %v349 = vpop.f32.mrf.mxu0
    %v350 = vadd.f32 0.0, %v349
    %351 = vdwg.mxu0
    %v352 = vadd.f32 %v268, %v290
    %v353 = vadd.f32 %v269, %v310
    %v354 = vadd.f32 %v270, %v330
    %v355 = vadd.f32 %v271, %v350
    %v356 = vxor.u32 %v352, 2147483648
    %v357 = vmul.f32 %v356, 1.442695
    %v358 = vpow.pop %v357
    %v359 = vadd.f32 %v358, 1.0
    %v360 = vrcp.pop %v359
    %v361 = vmul.f32 %v359, %v360
    %v362 = vsub.f32 1.0, %v361
    %v363 = vmul.f32 %v360, %v362
    %v364 = vadd.f32 %v360, %v363
    %vm365 = vweird.f32 %v359
    %vm366 = vweird.f32 %v360
    %vm367 = vmor %vm365, %vm366
    %v368 = vsel %vm367, %v360, %v364
    %v369 = vand.u32 2147483647, %v359
    %vm370 = vcmp.eq.f32.partialorder %v369, 8.507059e+37
    %v371 = vand.u32 %v359, 2147483648
    %v372 = vor.u32 1.1754944e-38, %v371
    %v373 = vsel %vm370, %v372, %v368
    %v374 = vmul.f32 1.0, %v373
    %v375 = vxor.u32 %v353, 2147483648
    %v376 = vmul.f32 %v375, 1.442695
    %v377 = vpow.pop %v376
    %v378 = vadd.f32 %v377, 1.0
    %v379 = vrcp.pop %v378
    %v380 = vmul.f32 %v378, %v379
    %v381 = vsub.f32 1.0, %v380
    %v382 = vmul.f32 %v379, %v381
    %v383 = vadd.f32 %v379, %v382
    %vm384 = vweird.f32 %v378
    %vm385 = vweird.f32 %v379
    %vm386 = vmor %vm384, %vm385
    %v387 = vsel %vm386, %v379, %v383
    %v388 = vand.u32 2147483647, %v378
    %vm389 = vcmp.eq.f32.partialorder %v388, 8.507059e+37
    %v390 = vand.u32 %v378, 2147483648
    %v391 = vor.u32 1.1754944e-38, %v390
    %v392 = vsel %vm389, %v391, %v387
    %v393 = vmul.f32 1.0, %v392
    %v394 = vtanh.pop %v354
    %v395 = vxor.u32 %v355, 2147483648
    %v396 = vmul.f32 %v395, 1.442695
    %v397 = vpow.pop %v396
    %v398 = vadd.f32 %v397, 1.0
    %v399 = vrcp.pop %v398
    %v400 = vmul.f32 %v398, %v399
    %v401 = vsub.f32 1.0, %v400
    %v402 = vmul.f32 %v399, %v401
    %v403 = vadd.f32 %v399, %v402
    %vm404 = vweird.f32 %v398
    %vm405 = vweird.f32 %v399
    %vm406 = vmor %vm404, %vm405
    %v407 = vsel %vm406, %v399, %v403
    %v408 = vand.u32 2147483647, %v398
    %vm409 = vcmp.eq.f32.partialorder %v408, 8.507059e+37
    %v410 = vand.u32 %v398, 2147483648
    %v411 = vor.u32 1.1754944e-38, %v410
    %v412 = vsel %vm409, %v411, %v407
    %v413 = vmul.f32 1.0, %v412
    %v414 = vmul.f32 %v393, %v264
    %v415 = vmul.f32 %v374, %v394
    %v416 = vadd.f32 %v414, %v415
    %v417 = vtanh.pop %v416
    %v418 = vmul.f32 %v413, %v417
    %s419 = scalar_lea.vmem [#allocation4], 64
    %v420 = vld [vmem:[%s419] sm:$0xff]
    %v421 = vld [vmem:[%s419 + $0x8] sm:$0xff]
    %v422 = vld [vmem:[%s419 + $0x10] sm:$0xff]
    %v423 = vld [vmem:[%s419 + $0x18] sm:$0xff]
    %424 = vmatpush.msra.mxu0 %v112
    %425 = vmatpush.msra.mxu0 %v108
    %426 = vmatpush.msra.mxu0 %v104
    %427 = vmatpush.msra.mxu0 %v100
    %428 = vmatpush.msra.mxu0 %v96
    %429 = vmatpush.msra.mxu0 %v92
    %430 = vmatpush.msra.mxu0 %v88
    %431 = vmatpush.msra.mxu0 %v84
    %432 = vmatpush.msra.mxu0 %v80
    %433 = vmatpush.msra.mxu0 %v76
    %434 = vmatpush.msra.mxu0 %v72
    %435 = vmatpush.msra.mxu0 %v68
    %436 = vmatpush.msra.mxu0 %v64
    %437 = vmatpush.msra.mxu0 %v60
    %438 = vmatpush.msra.mxu0 %v56
    %439 = vmatpush.msra.mxu0 %v52
    %440 = vmatmul.f32.gmra.mxu0 %v418
    %v441 = vpop.f32.mrf.mxu0
    %v442 = vadd.f32 0.0, %v441
    %443 = vdwg.mxu0
    %444 = vmatpush.msra.mxu0 %v113
    %445 = vmatpush.msra.mxu0 %v109
    %446 = vmatpush.msra.mxu0 %v105
    %447 = vmatpush.msra.mxu0 %v101
    %448 = vmatpush.msra.mxu0 %v97
    %449 = vmatpush.msra.mxu0 %v93
    %450 = vmatpush.msra.mxu0 %v89
    %451 = vmatpush.msra.mxu0 %v85
    %452 = vmatpush.msra.mxu0 %v81
    %453 = vmatpush.msra.mxu0 %v77
    %454 = vmatpush.msra.mxu0 %v73
    %455 = vmatpush.msra.mxu0 %v69
    %456 = vmatpush.msra.mxu0 %v65
    %457 = vmatpush.msra.mxu0 %v61
    %458 = vmatpush.msra.mxu0 %v57
    %459 = vmatpush.msra.mxu0 %v53
    %460 = vmatmul.f32.gmra.mxu0 %v418
    %v461 = vpop.f32.mrf.mxu0
    %v462 = vadd.f32 0.0, %v461
    %463 = vdwg.mxu0
    %464 = vmatpush.msra.mxu0 %v114
    %465 = vmatpush.msra.mxu0 %v110
    %466 = vmatpush.msra.mxu0 %v106
    %467 = vmatpush.msra.mxu0 %v102
    %468 = vmatpush.msra.mxu0 %v98
    %469 = vmatpush.msra.mxu0 %v94
    %470 = vmatpush.msra.mxu0 %v90
    %471 = vmatpush.msra.mxu0 %v86
    %472 = vmatpush.msra.mxu0 %v82
    %473 = vmatpush.msra.mxu0 %v78
    %474 = vmatpush.msra.mxu0 %v74
    %475 = vmatpush.msra.mxu0 %v70
    %476 = vmatpush.msra.mxu0 %v66
    %477 = vmatpush.msra.mxu0 %v62
    %478 = vmatpush.msra.mxu0 %v58
    %479 = vmatpush.msra.mxu0 %v54
    %480 = vmatmul.f32.gmra.mxu0 %v418
    %v481 = vpop.f32.mrf.mxu0
    %v482 = vadd.f32 0.0, %v481
    %483 = vdwg.mxu0
    %484 = vmatpush.msra.mxu0 %v115
    %485 = vmatpush.msra.mxu0 %v111
    %486 = vmatpush.msra.mxu0 %v107
    %487 = vmatpush.msra.mxu0 %v103
    %488 = vmatpush.msra.mxu0 %v99
    %489 = vmatpush.msra.mxu0 %v95
    %490 = vmatpush.msra.mxu0 %v91
    %491 = vmatpush.msra.mxu0 %v87
    %492 = vmatpush.msra.mxu0 %v83
    %493 = vmatpush.msra.mxu0 %v79
    %494 = vmatpush.msra.mxu0 %v75
    %495 = vmatpush.msra.mxu0 %v71
    %496 = vmatpush.msra.mxu0 %v67
    %497 = vmatpush.msra.mxu0 %v63
    %498 = vmatpush.msra.mxu0 %v59
    %499 = vmatpush.msra.mxu0 %v55
    %500 = vmatmul.f32.gmra.mxu0 %v418
    %v501 = vpop.f32.mrf.mxu0
    %v502 = vadd.f32 0.0, %v501
    %503 = vdwg.mxu0
    %v504 = vadd.f32 %v420, %v442
    %v505 = vadd.f32 %v421, %v462
    %v506 = vadd.f32 %v422, %v482
    %v507 = vadd.f32 %v423, %v502
    %v508 = vxor.u32 %v504, 2147483648
    %v509 = vmul.f32 %v508, 1.442695
    %v510 = vpow.pop %v509
    %v511 = vadd.f32 %v510, 1.0
    %v512 = vrcp.pop %v511
    %v513 = vmul.f32 %v511, %v512
    %v514 = vsub.f32 1.0, %v513
    %v515 = vmul.f32 %v512, %v514
    %v516 = vadd.f32 %v512, %v515
    %vm517 = vweird.f32 %v511
    %vm518 = vweird.f32 %v512
    %vm519 = vmor %vm517, %vm518
    %v520 = vsel %vm519, %v512, %v516
    %v521 = vand.u32 2147483647, %v511
    %vm522 = vcmp.eq.f32.partialorder %v521, 8.507059e+37
    %v523 = vand.u32 %v511, 2147483648
    %v524 = vor.u32 1.1754944e-38, %v523
    %v525 = vsel %vm522, %v524, %v520
    %v526 = vmul.f32 1.0, %v525
    %v527 = vxor.u32 %v505, 2147483648
    %v528 = vmul.f32 %v527, 1.442695
    %v529 = vpow.pop %v528
    %v530 = vadd.f32 %v529, 1.0
    %v531 = vrcp.pop %v530
    %v532 = vmul.f32 %v530, %v531
    %v533 = vsub.f32 1.0, %v532
    %v534 = vmul.f32 %v531, %v533
    %v535 = vadd.f32 %v531, %v534
    %vm536 = vweird.f32 %v530
    %vm537 = vweird.f32 %v531
    %vm538 = vmor %vm536, %vm537
    %v539 = vsel %vm538, %v531, %v535
    %v540 = vand.u32 2147483647, %v530
    %vm541 = vcmp.eq.f32.partialorder %v540, 8.507059e+37
    %v542 = vand.u32 %v530, 2147483648
    %v543 = vor.u32 1.1754944e-38, %v542
    %v544 = vsel %vm541, %v543, %v539
    %v545 = vmul.f32 1.0, %v544
    %v546 = vtanh.pop %v506
    %v547 = vxor.u32 %v507, 2147483648
    %v548 = vmul.f32 %v547, 1.442695
    %v549 = vpow.pop %v548
    %v550 = vadd.f32 %v549, 1.0
    %v551 = vrcp.pop %v550
    %v552 = vmul.f32 %v550, %v551
    %v553 = vsub.f32 1.0, %v552
    %v554 = vmul.f32 %v551, %v553
    %v555 = vadd.f32 %v551, %v554
    %vm556 = vweird.f32 %v550
    %vm557 = vweird.f32 %v551
    %vm558 = vmor %vm556, %vm557
    %v559 = vsel %vm558, %v551, %v555
    %v560 = vand.u32 2147483647, %v550
    %vm561 = vcmp.eq.f32.partialorder %v560, 8.507059e+37
    %v562 = vand.u32 %v550, 2147483648
    %v563 = vor.u32 1.1754944e-38, %v562
    %v564 = vsel %vm561, %v563, %v559
    %v565 = vmul.f32 1.0, %v564
    %v566 = vmul.f32 %v545, %v416
    %v567 = vmul.f32 %v526, %v546
    %v568 = vadd.f32 %v566, %v567
    %v569 = vtanh.pop %v568
    %v570 = vmul.f32 %v565, %v569
    %s571 = scalar_lea.vmem [#allocation4], 96
    %v572 = vld [vmem:[%s571] sm:$0xff]
    %v573 = vld [vmem:[%s571 + $0x8] sm:$0xff]
    %v574 = vld [vmem:[%s571 + $0x10] sm:$0xff]
    %v575 = vld [vmem:[%s571 + $0x18] sm:$0xff]
    %576 = vmatpush.msra.mxu0 %v112
    %577 = vmatpush.msra.mxu0 %v108
    %578 = vmatpush.msra.mxu0 %v104
    %579 = vmatpush.msra.mxu0 %v100
    %580 = vmatpush.msra.mxu0 %v96
    %581 = vmatpush.msra.mxu0 %v92
    %582 = vmatpush.msra.mxu0 %v88
    %583 = vmatpush.msra.mxu0 %v84
    %584 = vmatpush.msra.mxu0 %v80
    %585 = vmatpush.msra.mxu0 %v76
    %586 = vmatpush.msra.mxu0 %v72
    %587 = vmatpush.msra.mxu0 %v68
    %588 = vmatpush.msra.mxu0 %v64
    %589 = vmatpush.msra.mxu0 %v60
    %590 = vmatpush.msra.mxu0 %v56
    %591 = vmatpush.msra.mxu0 %v52
    %592 = vmatmul.f32.gmra.mxu0 %v570
    %v593 = vpop.f32.mrf.mxu0
    %v594 = vadd.f32 0.0, %v593
    %595 = vdwg.mxu0
    %596 = vmatpush.msra.mxu0 %v113
    %597 = vmatpush.msra.mxu0 %v109
    %598 = vmatpush.msra.mxu0 %v105
    %599 = vmatpush.msra.mxu0 %v101
    %600 = vmatpush.msra.mxu0 %v97
    %601 = vmatpush.msra.mxu0 %v93
    %602 = vmatpush.msra.mxu0 %v89
    %603 = vmatpush.msra.mxu0 %v85
    %604 = vmatpush.msra.mxu0 %v81
    %605 = vmatpush.msra.mxu0 %v77
    %606 = vmatpush.msra.mxu0 %v73
    %607 = vmatpush.msra.mxu0 %v69
    %608 = vmatpush.msra.mxu0 %v65
    %609 = vmatpush.msra.mxu0 %v61
    %610 = vmatpush.msra.mxu0 %v57
    %611 = vmatpush.msra.mxu0 %v53
    %612 = vmatmul.f32.gmra.mxu0 %v570
    %v613 = vpop.f32.mrf.mxu0
    %v614 = vadd.f32 0.0, %v613
    %615 = vdwg.mxu0
    %616 = vmatpush.msra.mxu0 %v114
    %617 = vmatpush.msra.mxu0 %v110
    %618 = vmatpush.msra.mxu0 %v106
    %619 = vmatpush.msra.mxu0 %v102
    %620 = vmatpush.msra.mxu0 %v98
    %621 = vmatpush.msra.mxu0 %v94
    %622 = vmatpush.msra.mxu0 %v90
    %623 = vmatpush.msra.mxu0 %v86
    %624 = vmatpush.msra.mxu0 %v82
    %625 = vmatpush.msra.mxu0 %v78
    %626 = vmatpush.msra.mxu0 %v74
    %627 = vmatpush.msra.mxu0 %v70
    %628 = vmatpush.msra.mxu0 %v66
    %629 = vmatpush.msra.mxu0 %v62
    %630 = vmatpush.msra.mxu0 %v58
    %631 = vmatpush.msra.mxu0 %v54
    %632 = vmatmul.f32.gmra.mxu0 %v570
    %v633 = vpop.f32.mrf.mxu0
    %v634 = vadd.f32 0.0, %v633
    %635 = vdwg.mxu0
    %636 = vmatpush.msra.mxu0 %v115
    %637 = vmatpush.msra.mxu0 %v111
    %638 = vmatpush.msra.mxu0 %v107
    %639 = vmatpush.msra.mxu0 %v103
    %640 = vmatpush.msra.mxu0 %v99
    %641 = vmatpush.msra.mxu0 %v95
    %642 = vmatpush.msra.mxu0 %v91
    %643 = vmatpush.msra.mxu0 %v87
    %644 = vmatpush.msra.mxu0 %v83
    %645 = vmatpush.msra.mxu0 %v79
    %646 = vmatpush.msra.mxu0 %v75
    %647 = vmatpush.msra.mxu0 %v71
    %648 = vmatpush.msra.mxu0 %v67
    %649 = vmatpush.msra.mxu0 %v63
    %650 = vmatpush.msra.mxu0 %v59
    %651 = vmatpush.msra.mxu0 %v55
    %652 = vmatmul.f32.gmra.mxu0 %v570
    %v653 = vpop.f32.mrf.mxu0
    %v654 = vadd.f32 0.0, %v653
    %655 = vdwg.mxu0
    %v656 = vadd.f32 %v572, %v594
    %v657 = vadd.f32 %v573, %v614
    %v658 = vadd.f32 %v574, %v634
    %v659 = vadd.f32 %v575, %v654
    %v660 = vxor.u32 %v656, 2147483648
    %v661 = vmul.f32 %v660, 1.442695
    %v662 = vpow.pop %v661
    %v663 = vadd.f32 %v662, 1.0
    %v664 = vrcp.pop %v663
    %v665 = vmul.f32 %v663, %v664
    %v666 = vsub.f32 1.0, %v665
    %v667 = vmul.f32 %v664, %v666
    %v668 = vadd.f32 %v664, %v667
    %vm669 = vweird.f32 %v663
    %vm670 = vweird.f32 %v664
    %vm671 = vmor %vm669, %vm670
    %v672 = vsel %vm671, %v664, %v668
    %v673 = vand.u32 2147483647, %v663
    %vm674 = vcmp.eq.f32.partialorder %v673, 8.507059e+37
    %v675 = vand.u32 %v663, 2147483648
    %v676 = vor.u32 1.1754944e-38, %v675
    %v677 = vsel %vm674, %v676, %v672
    %v678 = vmul.f32 1.0, %v677
    %v679 = vxor.u32 %v657, 2147483648
    %v680 = vmul.f32 %v679, 1.442695
    %v681 = vpow.pop %v680
    %v682 = vadd.f32 %v681, 1.0
    %v683 = vrcp.pop %v682
    %v684 = vmul.f32 %v682, %v683
    %v685 = vsub.f32 1.0, %v684
    %v686 = vmul.f32 %v683, %v685
    %v687 = vadd.f32 %v683, %v686
    %vm688 = vweird.f32 %v682
    %vm689 = vweird.f32 %v683
    %vm690 = vmor %vm688, %vm689
    %v691 = vsel %vm690, %v683, %v687
    %v692 = vand.u32 2147483647, %v682
    %vm693 = vcmp.eq.f32.partialorder %v692, 8.507059e+37
    %v694 = vand.u32 %v682, 2147483648
    %v695 = vor.u32 1.1754944e-38, %v694
    %v696 = vsel %vm693, %v695, %v691
    %v697 = vmul.f32 1.0, %v696
    %v698 = vtanh.pop %v658
    %v699 = vxor.u32 %v659, 2147483648
    %v700 = vmul.f32 %v699, 1.442695
    %v701 = vpow.pop %v700
    %v702 = vadd.f32 %v701, 1.0
    %v703 = vrcp.pop %v702
    %v704 = vmul.f32 %v702, %v703
    %v705 = vsub.f32 1.0, %v704
    %v706 = vmul.f32 %v703, %v705
    %v707 = vadd.f32 %v703, %v706
    %vm708 = vweird.f32 %v702
    %vm709 = vweird.f32 %v703
    %vm710 = vmor %vm708, %vm709
    %v711 = vsel %vm710, %v703, %v707
    %v712 = vand.u32 2147483647, %v702
    %vm713 = vcmp.eq.f32.partialorder %v712, 8.507059e+37
    %v714 = vand.u32 %v702, 2147483648
    %v715 = vor.u32 1.1754944e-38, %v714
    %v716 = vsel %vm713, %v715, %v711
    %v717 = vmul.f32 1.0, %v716
    %v718 = vmul.f32 %v697, %v568
    %v719 = vmul.f32 %v678, %v698
    %v720 = vadd.f32 %v718, %v719
    %v721 = vtanh.pop %v720
    %v722 = vmul.f32 %v717, %v721
    %s723 = scalar_lea.vmem [#allocation4], 128
    %v724 = vld [vmem:[%s723] sm:$0xff]
    %v725 = vld [vmem:[%s723 + $0x8] sm:$0xff]
    %v726 = vld [vmem:[%s723 + $0x10] sm:$0xff]
    %v727 = vld [vmem:[%s723 + $0x18] sm:$0xff]
    %728 = vmatpush.msra.mxu0 %v112
    %729 = vmatpush.msra.mxu0 %v108
    %730 = vmatpush.msra.mxu0 %v104
    %731 = vmatpush.msra.mxu0 %v100
    %732 = vmatpush.msra.mxu0 %v96
    %733 = vmatpush.msra.mxu0 %v92
    %734 = vmatpush.msra.mxu0 %v88
    %735 = vmatpush.msra.mxu0 %v84
    %736 = vmatpush.msra.mxu0 %v80
    %737 = vmatpush.msra.mxu0 %v76
    %738 = vmatpush.msra.mxu0 %v72
    %739 = vmatpush.msra.mxu0 %v68
    %740 = vmatpush.msra.mxu0 %v64
    %741 = vmatpush.msra.mxu0 %v60
    %742 = vmatpush.msra.mxu0 %v56
    %743 = vmatpush.msra.mxu0 %v52
    %744 = vmatmul.f32.gmra.mxu0 %v722
    %v745 = vpop.f32.mrf.mxu0
    %v746 = vadd.f32 0.0, %v745
    %747 = vdwg.mxu0
    %748 = vmatpush.msra.mxu0 %v113
    %749 = vmatpush.msra.mxu0 %v109
    %750 = vmatpush.msra.mxu0 %v105
    %751 = vmatpush.msra.mxu0 %v101
    %752 = vmatpush.msra.mxu0 %v97
    %753 = vmatpush.msra.mxu0 %v93
    %754 = vmatpush.msra.mxu0 %v89
    %755 = vmatpush.msra.mxu0 %v85
    %756 = vmatpush.msra.mxu0 %v81
    %757 = vmatpush.msra.mxu0 %v77
    %758 = vmatpush.msra.mxu0 %v73
    %759 = vmatpush.msra.mxu0 %v69
    %760 = vmatpush.msra.mxu0 %v65
    %761 = vmatpush.msra.mxu0 %v61
    %762 = vmatpush.msra.mxu0 %v57
    %763 = vmatpush.msra.mxu0 %v53
    %764 = vmatmul.f32.gmra.mxu0 %v722
    %v765 = vpop.f32.mrf.mxu0
    %v766 = vadd.f32 0.0, %v765
    %767 = vdwg.mxu0
    %768 = vmatpush.msra.mxu0 %v114
    %769 = vmatpush.msra.mxu0 %v110
    %770 = vmatpush.msra.mxu0 %v106
    %771 = vmatpush.msra.mxu0 %v102
    %772 = vmatpush.msra.mxu0 %v98
    %773 = vmatpush.msra.mxu0 %v94
    %774 = vmatpush.msra.mxu0 %v90
    %775 = vmatpush.msra.mxu0 %v86
    %776 = vmatpush.msra.mxu0 %v82
    %777 = vmatpush.msra.mxu0 %v78
    %778 = vmatpush.msra.mxu0 %v74
    %779 = vmatpush.msra.mxu0 %v70
    %780 = vmatpush.msra.mxu0 %v66
    %781 = vmatpush.msra.mxu0 %v62
    %782 = vmatpush.msra.mxu0 %v58
    %783 = vmatpush.msra.mxu0 %v54
    %784 = vmatmul.f32.gmra.mxu0 %v722
    %v785 = vpop.f32.mrf.mxu0
    %v786 = vadd.f32 0.0, %v785
    %787 = vdwg.mxu0
    %788 = vmatpush.msra.mxu0 %v115
    %789 = vmatpush.msra.mxu0 %v111
    %790 = vmatpush.msra.mxu0 %v107
    %791 = vmatpush.msra.mxu0 %v103
    %792 = vmatpush.msra.mxu0 %v99
    %793 = vmatpush.msra.mxu0 %v95
    %794 = vmatpush.msra.mxu0 %v91
    %795 = vmatpush.msra.mxu0 %v87
    %796 = vmatpush.msra.mxu0 %v83
    %797 = vmatpush.msra.mxu0 %v79
    %798 = vmatpush.msra.mxu0 %v75
    %799 = vmatpush.msra.mxu0 %v71
    %800 = vmatpush.msra.mxu0 %v67
    %801 = vmatpush.msra.mxu0 %v63
    %802 = vmatpush.msra.mxu0 %v59
    %803 = vmatpush.msra.mxu0 %v55
    %804 = vmatmul.f32.gmra.mxu0 %v722
    %v805 = vpop.f32.mrf.mxu0
    %v806 = vadd.f32 0.0, %v805
    %807 = vdwg.mxu0
    %v808 = vadd.f32 %v724, %v746
    %v809 = vadd.f32 %v725, %v766
    %v810 = vadd.f32 %v726, %v786
    %v811 = vadd.f32 %v727, %v806
    %v812 = vxor.u32 %v808, 2147483648
    %v813 = vmul.f32 %v812, 1.442695
    %v814 = vpow.pop %v813
    %v815 = vadd.f32 %v814, 1.0
    %v816 = vrcp.pop %v815
    %v817 = vmul.f32 %v815, %v816
    %v818 = vsub.f32 1.0, %v817
    %v819 = vmul.f32 %v816, %v818
    %v820 = vadd.f32 %v816, %v819
    %vm821 = vweird.f32 %v815
    %vm822 = vweird.f32 %v816
    %vm823 = vmor %vm821, %vm822
    %v824 = vsel %vm823, %v816, %v820
    %v825 = vand.u32 2147483647, %v815
    %vm826 = vcmp.eq.f32.partialorder %v825, 8.507059e+37
    %v827 = vand.u32 %v815, 2147483648
    %v828 = vor.u32 1.1754944e-38, %v827
    %v829 = vsel %vm826, %v828, %v824
    %v830 = vmul.f32 1.0, %v829
    %v831 = vxor.u32 %v809, 2147483648
    %v832 = vmul.f32 %v831, 1.442695
    %v833 = vpow.pop %v832
    %v834 = vadd.f32 %v833, 1.0
    %v835 = vrcp.pop %v834
    %v836 = vmul.f32 %v834, %v835
    %v837 = vsub.f32 1.0, %v836
    %v838 = vmul.f32 %v835, %v837
    %v839 = vadd.f32 %v835, %v838
    %vm840 = vweird.f32 %v834
    %vm841 = vweird.f32 %v835
    %vm842 = vmor %vm840, %vm841
    %v843 = vsel %vm842, %v835, %v839
    %v844 = vand.u32 2147483647, %v834
    %vm845 = vcmp.eq.f32.partialorder %v844, 8.507059e+37
    %v846 = vand.u32 %v834, 2147483648
    %v847 = vor.u32 1.1754944e-38, %v846
    %v848 = vsel %vm845, %v847, %v843
    %v849 = vmul.f32 1.0, %v848
    %v850 = vtanh.pop %v810
    %v851 = vxor.u32 %v811, 2147483648
    %v852 = vmul.f32 %v851, 1.442695
    %v853 = vpow.pop %v852
    %v854 = vadd.f32 %v853, 1.0
    %v855 = vrcp.pop %v854
    %v856 = vmul.f32 %v854, %v855
    %v857 = vsub.f32 1.0, %v856
    %v858 = vmul.f32 %v855, %v857
    %v859 = vadd.f32 %v855, %v858
    %vm860 = vweird.f32 %v854
    %vm861 = vweird.f32 %v855
    %vm862 = vmor %vm860, %vm861
    %v863 = vsel %vm862, %v855, %v859
    %v864 = vand.u32 2147483647, %v854
    %vm865 = vcmp.eq.f32.partialorder %v864, 8.507059e+37
    %v866 = vand.u32 %v854, 2147483648
    %v867 = vor.u32 1.1754944e-38, %v866
    %v868 = vsel %vm865, %v867, %v863
    %v869 = vmul.f32 1.0, %v868
    %v870 = vmul.f32 %v849, %v720
    %v871 = vmul.f32 %v830, %v850
    %v872 = vadd.f32 %v870, %v871
    %v873 = vtanh.pop %v872
    %v874 = vmul.f32 %v869, %v873
    %s875 = scalar_lea.vmem [#allocation4], 160
    %v876 = vld [vmem:[%s875] sm:$0xff]
    %v877 = vld [vmem:[%s875 + $0x8] sm:$0xff]
    %v878 = vld [vmem:[%s875 + $0x10] sm:$0xff]
    %v879 = vld [vmem:[%s875 + $0x18] sm:$0xff]
    %880 = vmatpush.msra.mxu0 %v112
    %881 = vmatpush.msra.mxu0 %v108
    %882 = vmatpush.msra.mxu0 %v104
    %883 = vmatpush.msra.mxu0 %v100
    %884 = vmatpush.msra.mxu0 %v96
    %885 = vmatpush.msra.mxu0 %v92
    %886 = vmatpush.msra.mxu0 %v88
    %887 = vmatpush.msra.mxu0 %v84
    %888 = vmatpush.msra.mxu0 %v80
    %889 = vmatpush.msra.mxu0 %v76
    %890 = vmatpush.msra.mxu0 %v72
    %891 = vmatpush.msra.mxu0 %v68
    %892 = vmatpush.msra.mxu0 %v64
    %893 = vmatpush.msra.mxu0 %v60
    %894 = vmatpush.msra.mxu0 %v56
    %895 = vmatpush.msra.mxu0 %v52
    %896 = vmatmul.f32.gmra.mxu0 %v874
    %v897 = vpop.f32.mrf.mxu0
    %v898 = vadd.f32 0.0, %v897
    %899 = vdwg.mxu0
    %900 = vmatpush.msra.mxu0 %v113
    %901 = vmatpush.msra.mxu0 %v109
    %902 = vmatpush.msra.mxu0 %v105
    %903 = vmatpush.msra.mxu0 %v101
    %904 = vmatpush.msra.mxu0 %v97
    %905 = vmatpush.msra.mxu0 %v93
    %906 = vmatpush.msra.mxu0 %v89
    %907 = vmatpush.msra.mxu0 %v85
    %908 = vmatpush.msra.mxu0 %v81
    %909 = vmatpush.msra.mxu0 %v77
    %910 = vmatpush.msra.mxu0 %v73
    %911 = vmatpush.msra.mxu0 %v69
    %912 = vmatpush.msra.mxu0 %v65
    %913 = vmatpush.msra.mxu0 %v61
    %914 = vmatpush.msra.mxu0 %v57
    %915 = vmatpush.msra.mxu0 %v53
    %916 = vmatmul.f32.gmra.mxu0 %v874
    %v917 = vpop.f32.mrf.mxu0
    %v918 = vadd.f32 0.0, %v917
    %919 = vdwg.mxu0
    %920 = vmatpush.msra.mxu0 %v114
    %921 = vmatpush.msra.mxu0 %v110
    %922 = vmatpush.msra.mxu0 %v106
    %923 = vmatpush.msra.mxu0 %v102
    %924 = vmatpush.msra.mxu0 %v98
    %925 = vmatpush.msra.mxu0 %v94
    %926 = vmatpush.msra.mxu0 %v90
    %927 = vmatpush.msra.mxu0 %v86
    %928 = vmatpush.msra.mxu0 %v82
    %929 = vmatpush.msra.mxu0 %v78
    %930 = vmatpush.msra.mxu0 %v74
    %931 = vmatpush.msra.mxu0 %v70
    %932 = vmatpush.msra.mxu0 %v66
    %933 = vmatpush.msra.mxu0 %v62
    %934 = vmatpush.msra.mxu0 %v58
    %935 = vmatpush.msra.mxu0 %v54
    %936 = vmatmul.f32.gmra.mxu0 %v874
    %v937 = vpop.f32.mrf.mxu0
    %v938 = vadd.f32 0.0, %v937
    %939 = vdwg.mxu0
    %940 = vmatpush.msra.mxu0 %v115
    %941 = vmatpush.msra.mxu0 %v111
    %942 = vmatpush.msra.mxu0 %v107
    %943 = vmatpush.msra.mxu0 %v103
    %944 = vmatpush.msra.mxu0 %v99
    %945 = vmatpush.msra.mxu0 %v95
    %946 = vmatpush.msra.mxu0 %v91
    %947 = vmatpush.msra.mxu0 %v87
    %948 = vmatpush.msra.mxu0 %v83
    %949 = vmatpush.msra.mxu0 %v79
    %950 = vmatpush.msra.mxu0 %v75
    %951 = vmatpush.msra.mxu0 %v71
    %952 = vmatpush.msra.mxu0 %v67
    %953 = vmatpush.msra.mxu0 %v63
    %954 = vmatpush.msra.mxu0 %v59
    %955 = vmatpush.msra.mxu0 %v55
    %956 = vmatmul.f32.gmra.mxu0 %v874
    %v957 = vpop.f32.mrf.mxu0
    %v958 = vadd.f32 0.0, %v957
    %959 = vdwg.mxu0
    %v960 = vadd.f32 %v876, %v898
    %v961 = vadd.f32 %v877, %v918
    %v962 = vadd.f32 %v878, %v938
    %v963 = vadd.f32 %v879, %v958
    %v964 = vxor.u32 %v960, 2147483648
    %v965 = vmul.f32 %v964, 1.442695
    %v966 = vpow.pop %v965
    %v967 = vadd.f32 %v966, 1.0
    %v968 = vrcp.pop %v967
    %v969 = vmul.f32 %v967, %v968
    %v970 = vsub.f32 1.0, %v969
    %v971 = vmul.f32 %v968, %v970
    %v972 = vadd.f32 %v968, %v971
    %vm973 = vweird.f32 %v967
    %vm974 = vweird.f32 %v968
    %vm975 = vmor %vm973, %vm974
    %v976 = vsel %vm975, %v968, %v972
    %v977 = vand.u32 2147483647, %v967
    %vm978 = vcmp.eq.f32.partialorder %v977, 8.507059e+37
    %v979 = vand.u32 %v967, 2147483648
    %v980 = vor.u32 1.1754944e-38, %v979
    %v981 = vsel %vm978, %v980, %v976
    %v982 = vmul.f32 1.0, %v981
    %v983 = vxor.u32 %v961, 2147483648
    %v984 = vmul.f32 %v983, 1.442695
    %v985 = vpow.pop %v984
    %v986 = vadd.f32 %v985, 1.0
    %v987 = vrcp.pop %v986
    %v988 = vmul.f32 %v986, %v987
    %v989 = vsub.f32 1.0, %v988
    %v990 = vmul.f32 %v987, %v989
    %v991 = vadd.f32 %v987, %v990
    %vm992 = vweird.f32 %v986
    %vm993 = vweird.f32 %v987
    %vm994 = vmor %vm992, %vm993
    %v995 = vsel %vm994, %v987, %v991
    %v996 = vand.u32 2147483647, %v986
    %vm997 = vcmp.eq.f32.partialorder %v996, 8.507059e+37
    %v998 = vand.u32 %v986, 2147483648
    %v999 = vor.u32 1.1754944e-38, %v998
    %v1000 = vsel %vm997, %v999, %v995
    %v1001 = vmul.f32 1.0, %v1000
    %v1002 = vtanh.pop %v962
    %v1003 = vxor.u32 %v963, 2147483648
    %v1004 = vmul.f32 %v1003, 1.442695
    %v1005 = vpow.pop %v1004
    %v1006 = vadd.f32 %v1005, 1.0
    %v1007 = vrcp.pop %v1006
    %v1008 = vmul.f32 %v1006, %v1007
    %v1009 = vsub.f32 1.0, %v1008
    %v1010 = vmul.f32 %v1007, %v1009
    %v1011 = vadd.f32 %v1007, %v1010
    %vm1012 = vweird.f32 %v1006
    %vm1013 = vweird.f32 %v1007
    %vm1014 = vmor %vm1012, %vm1013
    %v1015 = vsel %vm1014, %v1007, %v1011
    %v1016 = vand.u32 2147483647, %v1006
    %vm1017 = vcmp.eq.f32.partialorder %v1016, 8.507059e+37
    %v1018 = vand.u32 %v1006, 2147483648
    %v1019 = vor.u32 1.1754944e-38, %v1018
    %v1020 = vsel %vm1017, %v1019, %v1015
    %v1021 = vmul.f32 1.0, %v1020
    %v1022 = vmul.f32 %v1001, %v872
    %v1023 = vmul.f32 %v982, %v1002
    %v1024 = vadd.f32 %v1022, %v1023
    %v1025 = vtanh.pop %v1024
    %v1026 = vmul.f32 %v1021, %v1025
    %s1027 = scalar_lea.vmem [#allocation4], 192
    %v1028 = vld [vmem:[%s1027] sm:$0xff]
    %v1029 = vld [vmem:[%s1027 + $0x8] sm:$0xff]
    %v1030 = vld [vmem:[%s1027 + $0x10] sm:$0xff]
    %v1031 = vld [vmem:[%s1027 + $0x18] sm:$0xff]
    %1032 = vmatpush.msra.mxu0 %v112
    %1033 = vmatpush.msra.mxu0 %v108
    %1034 = vmatpush.msra.mxu0 %v104
    %1035 = vmatpush.msra.mxu0 %v100
    %1036 = vmatpush.msra.mxu0 %v96
    %1037 = vmatpush.msra.mxu0 %v92
    %1038 = vmatpush.msra.mxu0 %v88
    %1039 = vmatpush.msra.mxu0 %v84
    %1040 = vmatpush.msra.mxu0 %v80
    %1041 = vmatpush.msra.mxu0 %v76
    %1042 = vmatpush.msra.mxu0 %v72
    %1043 = vmatpush.msra.mxu0 %v68
    %1044 = vmatpush.msra.mxu0 %v64
    %1045 = vmatpush.msra.mxu0 %v60
    %1046 = vmatpush.msra.mxu0 %v56
    %1047 = vmatpush.msra.mxu0 %v52
    %1048 = vmatmul.f32.gmra.mxu0 %v1026
    %v1049 = vpop.f32.mrf.mxu0
    %v1050 = vadd.f32 0.0, %v1049
    %1051 = vdwg.mxu0
    %1052 = vmatpush.msra.mxu0 %v113
    %1053 = vmatpush.msra.mxu0 %v109
    %1054 = vmatpush.msra.mxu0 %v105
    %1055 = vmatpush.msra.mxu0 %v101
    %1056 = vmatpush.msra.mxu0 %v97
    %1057 = vmatpush.msra.mxu0 %v93
    %1058 = vmatpush.msra.mxu0 %v89
    %1059 = vmatpush.msra.mxu0 %v85
    %1060 = vmatpush.msra.mxu0 %v81
    %1061 = vmatpush.msra.mxu0 %v77
    %1062 = vmatpush.msra.mxu0 %v73
    %1063 = vmatpush.msra.mxu0 %v69
    %1064 = vmatpush.msra.mxu0 %v65
    %1065 = vmatpush.msra.mxu0 %v61
    %1066 = vmatpush.msra.mxu0 %v57
    %1067 = vmatpush.msra.mxu0 %v53
    %1068 = vmatmul.f32.gmra.mxu0 %v1026
    %v1069 = vpop.f32.mrf.mxu0
    %v1070 = vadd.f32 0.0, %v1069
    %1071 = vdwg.mxu0
    %1072 = vmatpush.msra.mxu0 %v114
    %1073 = vmatpush.msra.mxu0 %v110
    %1074 = vmatpush.msra.mxu0 %v106
    %1075 = vmatpush.msra.mxu0 %v102
    %1076 = vmatpush.msra.mxu0 %v98
    %1077 = vmatpush.msra.mxu0 %v94
    %1078 = vmatpush.msra.mxu0 %v90
    %1079 = vmatpush.msra.mxu0 %v86
    %1080 = vmatpush.msra.mxu0 %v82
    %1081 = vmatpush.msra.mxu0 %v78
    %1082 = vmatpush.msra.mxu0 %v74
    %1083 = vmatpush.msra.mxu0 %v70
    %1084 = vmatpush.msra.mxu0 %v66
    %1085 = vmatpush.msra.mxu0 %v62
    %1086 = vmatpush.msra.mxu0 %v58
    %1087 = vmatpush.msra.mxu0 %v54
    %1088 = vmatmul.f32.gmra.mxu0 %v1026
    %v1089 = vpop.f32.mrf.mxu0
    %v1090 = vadd.f32 0.0, %v1089
    %1091 = vdwg.mxu0
    %1092 = vmatpush.msra.mxu0 %v115
    %1093 = vmatpush.msra.mxu0 %v111
    %1094 = vmatpush.msra.mxu0 %v107
    %1095 = vmatpush.msra.mxu0 %v103
    %1096 = vmatpush.msra.mxu0 %v99
    %1097 = vmatpush.msra.mxu0 %v95
    %1098 = vmatpush.msra.mxu0 %v91
    %1099 = vmatpush.msra.mxu0 %v87
    %1100 = vmatpush.msra.mxu0 %v83
    %1101 = vmatpush.msra.mxu0 %v79
    %1102 = vmatpush.msra.mxu0 %v75
    %1103 = vmatpush.msra.mxu0 %v71
    %1104 = vmatpush.msra.mxu0 %v67
    %1105 = vmatpush.msra.mxu0 %v63
    %1106 = vmatpush.msra.mxu0 %v59
    %1107 = vmatpush.msra.mxu0 %v55
    %1108 = vmatmul.f32.gmra.mxu0 %v1026
    %v1109 = vpop.f32.mrf.mxu0
    %v1110 = vadd.f32 0.0, %v1109
    %1111 = vdwg.mxu0
    %v1112 = vadd.f32 %v1028, %v1050
    %v1113 = vadd.f32 %v1029, %v1070
    %v1114 = vadd.f32 %v1030, %v1090
    %v1115 = vadd.f32 %v1031, %v1110
    %v1116 = vxor.u32 %v1112, 2147483648
    %v1117 = vmul.f32 %v1116, 1.442695
    %v1118 = vpow.pop %v1117
    %v1119 = vadd.f32 %v1118, 1.0
    %v1120 = vrcp.pop %v1119
    %v1121 = vmul.f32 %v1119, %v1120
    %v1122 = vsub.f32 1.0, %v1121
    %v1123 = vmul.f32 %v1120, %v1122
    %v1124 = vadd.f32 %v1120, %v1123
    %vm1125 = vweird.f32 %v1119
    %vm1126 = vweird.f32 %v1120
    %vm1127 = vmor %vm1125, %vm1126
    %v1128 = vsel %vm1127, %v1120, %v1124
    %v1129 = vand.u32 2147483647, %v1119
    %vm1130 = vcmp.eq.f32.partialorder %v1129, 8.507059e+37
    %v1131 = vand.u32 %v1119, 2147483648
    %v1132 = vor.u32 1.1754944e-38, %v1131
    %v1133 = vsel %vm1130, %v1132, %v1128
    %v1134 = vmul.f32 1.0, %v1133
    %v1135 = vxor.u32 %v1113, 2147483648
    %v1136 = vmul.f32 %v1135, 1.442695
    %v1137 = vpow.pop %v1136
    %v1138 = vadd.f32 %v1137, 1.0
    %v1139 = vrcp.pop %v1138
    %v1140 = vmul.f32 %v1138, %v1139
    %v1141 = vsub.f32 1.0, %v1140
    %v1142 = vmul.f32 %v1139, %v1141
    %v1143 = vadd.f32 %v1139, %v1142
    %vm1144 = vweird.f32 %v1138
    %vm1145 = vweird.f32 %v1139
    %vm1146 = vmor %vm1144, %vm1145
    %v1147 = vsel %vm1146, %v1139, %v1143
    %v1148 = vand.u32 2147483647, %v1138
    %vm1149 = vcmp.eq.f32.partialorder %v1148, 8.507059e+37
    %v1150 = vand.u32 %v1138, 2147483648
    %v1151 = vor.u32 1.1754944e-38, %v1150
    %v1152 = vsel %vm1149, %v1151, %v1147
    %v1153 = vmul.f32 1.0, %v1152
    %v1154 = vtanh.pop %v1114
    %v1155 = vxor.u32 %v1115, 2147483648
    %v1156 = vmul.f32 %v1155, 1.442695
    %v1157 = vpow.pop %v1156
    %v1158 = vadd.f32 %v1157, 1.0
    %v1159 = vrcp.pop %v1158
    %v1160 = vmul.f32 %v1158, %v1159
    %v1161 = vsub.f32 1.0, %v1160
    %v1162 = vmul.f32 %v1159, %v1161
    %v1163 = vadd.f32 %v1159, %v1162
    %vm1164 = vweird.f32 %v1158
    %vm1165 = vweird.f32 %v1159
    %vm1166 = vmor %vm1164, %vm1165
    %v1167 = vsel %vm1166, %v1159, %v1163
    %v1168 = vand.u32 2147483647, %v1158
    %vm1169 = vcmp.eq.f32.partialorder %v1168, 8.507059e+37
    %v1170 = vand.u32 %v1158, 2147483648
    %v1171 = vor.u32 1.1754944e-38, %v1170
    %v1172 = vsel %vm1169, %v1171, %v1167
    %v1173 = vmul.f32 1.0, %v1172
    %v1174 = vmul.f32 %v1153, %v1024
    %v1175 = vmul.f32 %v1134, %v1154
    %v1176 = vadd.f32 %v1174, %v1175
    %v1177 = vtanh.pop %v1176
    %v1178 = vmul.f32 %v1173, %v1177
    %s1179 = scalar_lea.vmem [#allocation4], 224
    %v1180 = vld [vmem:[%s1179] sm:$0xff]
    %v1181 = vld [vmem:[%s1179 + $0x8] sm:$0xff]
    %v1182 = vld [vmem:[%s1179 + $0x10] sm:$0xff]
    %v1183 = vld [vmem:[%s1179 + $0x18] sm:$0xff]
    %1184 = vmatpush.msra.mxu0 %v112
    %1185 = vmatpush.msra.mxu0 %v108
    %1186 = vmatpush.msra.mxu0 %v104
    %1187 = vmatpush.msra.mxu0 %v100
    %1188 = vmatpush.msra.mxu0 %v96
    %1189 = vmatpush.msra.mxu0 %v92
    %1190 = vmatpush.msra.mxu0 %v88
    %1191 = vmatpush.msra.mxu0 %v84
    %1192 = vmatpush.msra.mxu0 %v80
    %1193 = vmatpush.msra.mxu0 %v76
    %1194 = vmatpush.msra.mxu0 %v72
    %1195 = vmatpush.msra.mxu0 %v68
    %1196 = vmatpush.msra.mxu0 %v64
    %1197 = vmatpush.msra.mxu0 %v60
    %1198 = vmatpush.msra.mxu0 %v56
    %1199 = vmatpush.msra.mxu0 %v52
    %1200 = vmatmul.f32.gmra.mxu0 %v1178
    %v1201 = vpop.f32.mrf.mxu0
    %v1202 = vadd.f32 0.0, %v1201
    %1203 = vdwg.mxu0
    %1204 = vmatpush.msra.mxu0 %v113
    %1205 = vmatpush.msra.mxu0 %v109
    %1206 = vmatpush.msra.mxu0 %v105
    %1207 = vmatpush.msra.mxu0 %v101
    %1208 = vmatpush.msra.mxu0 %v97
    %1209 = vmatpush.msra.mxu0 %v93
    %1210 = vmatpush.msra.mxu0 %v89
    %1211 = vmatpush.msra.mxu0 %v85
    %1212 = vmatpush.msra.mxu0 %v81
    %1213 = vmatpush.msra.mxu0 %v77
    %1214 = vmatpush.msra.mxu0 %v73
    %1215 = vmatpush.msra.mxu0 %v69
    %1216 = vmatpush.msra.mxu0 %v65
    %1217 = vmatpush.msra.mxu0 %v61
    %1218 = vmatpush.msra.mxu0 %v57
    %1219 = vmatpush.msra.mxu0 %v53
    %1220 = vmatmul.f32.gmra.mxu0 %v1178
    %v1221 = vpop.f32.mrf.mxu0
    %v1222 = vadd.f32 0.0, %v1221
    %1223 = vdwg.mxu0
    %1224 = vmatpush.msra.mxu0 %v114
    %1225 = vmatpush.msra.mxu0 %v110
    %1226 = vmatpush.msra.mxu0 %v106
    %1227 = vmatpush.msra.mxu0 %v102
    %1228 = vmatpush.msra.mxu0 %v98
    %1229 = vmatpush.msra.mxu0 %v94
    %1230 = vmatpush.msra.mxu0 %v90
    %1231 = vmatpush.msra.mxu0 %v86
    %1232 = vmatpush.msra.mxu0 %v82
    %1233 = vmatpush.msra.mxu0 %v78
    %1234 = vmatpush.msra.mxu0 %v74
    %1235 = vmatpush.msra.mxu0 %v70
    %1236 = vmatpush.msra.mxu0 %v66
    %1237 = vmatpush.msra.mxu0 %v62
    %1238 = vmatpush.msra.mxu0 %v58
    %1239 = vmatpush.msra.mxu0 %v54
    %1240 = vmatmul.f32.gmra.mxu0 %v1178
    %v1241 = vpop.f32.mrf.mxu0
    %v1242 = vadd.f32 0.0, %v1241
    %1243 = vdwg.mxu0
    %1244 = vmatpush.msra.mxu0 %v115
    %1245 = vmatpush.msra.mxu0 %v111
    %1246 = vmatpush.msra.mxu0 %v107
    %1247 = vmatpush.msra.mxu0 %v103
    %1248 = vmatpush.msra.mxu0 %v99
    %1249 = vmatpush.msra.mxu0 %v95
    %1250 = vmatpush.msra.mxu0 %v91
    %1251 = vmatpush.msra.mxu0 %v87
    %1252 = vmatpush.msra.mxu0 %v83
    %1253 = vmatpush.msra.mxu0 %v79
    %1254 = vmatpush.msra.mxu0 %v75
    %1255 = vmatpush.msra.mxu0 %v71
    %1256 = vmatpush.msra.mxu0 %v67
    %1257 = vmatpush.msra.mxu0 %v63
    %1258 = vmatpush.msra.mxu0 %v59
    %1259 = vmatpush.msra.mxu0 %v55
    %1260 = vmatmul.f32.gmra.mxu0 %v1178
    %v1261 = vpop.f32.mrf.mxu0
    %v1262 = vadd.f32 0.0, %v1261
    %1263 = vdwg.mxu0
    %v1264 = vadd.f32 %v1180, %v1202
    %v1265 = vadd.f32 %v1181, %v1222
    %v1266 = vadd.f32 %v1182, %v1242
    %v1267 = vadd.f32 %v1183, %v1262
    %v1268 = vxor.u32 %v1264, 2147483648
    %v1269 = vmul.f32 %v1268, 1.442695
    %v1270 = vpow.pop %v1269
    %v1271 = vadd.f32 %v1270, 1.0
    %v1272 = vrcp.pop %v1271
    %v1273 = vmul.f32 %v1271, %v1272
    %v1274 = vsub.f32 1.0, %v1273
    %v1275 = vmul.f32 %v1272, %v1274
    %v1276 = vadd.f32 %v1272, %v1275
    %vm1277 = vweird.f32 %v1271
    %vm1278 = vweird.f32 %v1272
    %vm1279 = vmor %vm1277, %vm1278
    %v1280 = vsel %vm1279, %v1272, %v1276
    %v1281 = vand.u32 2147483647, %v1271
    %vm1282 = vcmp.eq.f32.partialorder %v1281, 8.507059e+37
    %v1283 = vand.u32 %v1271, 2147483648
    %v1284 = vor.u32 1.1754944e-38, %v1283
    %v1285 = vsel %vm1282, %v1284, %v1280
    %v1286 = vmul.f32 1.0, %v1285
    %v1287 = vxor.u32 %v1265, 2147483648
    %v1288 = vmul.f32 %v1287, 1.442695
    %v1289 = vpow.pop %v1288
    %v1290 = vadd.f32 %v1289, 1.0
    %v1291 = vrcp.pop %v1290
    %v1292 = vmul.f32 %v1290, %v1291
    %v1293 = vsub.f32 1.0, %v1292
    %v1294 = vmul.f32 %v1291, %v1293
    %v1295 = vadd.f32 %v1291, %v1294
    %vm1296 = vweird.f32 %v1290
    %vm1297 = vweird.f32 %v1291
    %vm1298 = vmor %vm1296, %vm1297
    %v1299 = vsel %vm1298, %v1291, %v1295
    %v1300 = vand.u32 2147483647, %v1290
    %vm1301 = vcmp.eq.f32.partialorder %v1300, 8.507059e+37
    %v1302 = vand.u32 %v1290, 2147483648
    %v1303 = vor.u32 1.1754944e-38, %v1302
    %v1304 = vsel %vm1301, %v1303, %v1299
    %v1305 = vmul.f32 1.0, %v1304
    %v1306 = vtanh.pop %v1266
    %v1307 = vxor.u32 %v1267, 2147483648
    %v1308 = vmul.f32 %v1307, 1.442695
    %v1309 = vpow.pop %v1308
    %v1310 = vadd.f32 %v1309, 1.0
    %v1311 = vrcp.pop %v1310
    %v1312 = vmul.f32 %v1310, %v1311
    %v1313 = vsub.f32 1.0, %v1312
    %v1314 = vmul.f32 %v1311, %v1313
    %v1315 = vadd.f32 %v1311, %v1314
    %vm1316 = vweird.f32 %v1310
    %vm1317 = vweird.f32 %v1311
    %vm1318 = vmor %vm1316, %vm1317
    %v1319 = vsel %vm1318, %v1311, %v1315
    %v1320 = vand.u32 2147483647, %v1310
    %vm1321 = vcmp.eq.f32.partialorder %v1320, 8.507059e+37
    %v1322 = vand.u32 %v1310, 2147483648
    %v1323 = vor.u32 1.1754944e-38, %v1322
    %v1324 = vsel %vm1321, %v1323, %v1319
    %v1325 = vmul.f32 1.0, %v1324
    %v1326 = vmul.f32 %v1305, %v1176
    %v1327 = vmul.f32 %v1286, %v1306
    %v1328 = vadd.f32 %v1326, %v1327
    %v1329 = vtanh.pop %v1328
    %v1330 = vmul.f32 %v1325, %v1329
    %1331 = vst [vmem:[#allocation2] sm:$0xff] %v1330
    %1332 = vst [vmem:[#allocation3] sm:$0xff] %v1328
    // Predicated region
    $region22: #{tpu_custom_call.1} parent=1 // pred_check
      %p1333 = pneg %p44
    $region23: #{tpu_custom_call.1} parent=1 // pred_check_branch
      %1335 = sbr.rel (%p1333) target = $region25
    $region24: #{tpu_custom_call.1} parent=1 // pred_region
      %1336 = vst [vmem:[#allocation9] sm:$0xff] %v1330
    $region25: #{tpu_custom_call.1} parent=1 // pred_fallthru
      _
    // Predicated region
    $region26: #{tpu_custom_call.1} parent=1 // pred_check
      _
    $region27: #{tpu_custom_call.1} parent=1 // pred_check_branch
      %1338 = sbr.rel (0) target = $region29
    $region28: #{tpu_custom_call.1} parent=1 // pred_region
      %1340 = vsyncadd [#allocation6], 0
      %s1342 = sshll.u32 [#allocation9], 4
      %s1343 = int_to_ptr.vmem [resolvable:$true] %s1342
      %s1344 = sshll.u32 %s2, 4
      %s1345 = int_to_ptr.hbm [resolvable:$true] %s1344
      %1347 = dma.vmem_to_hbm [thread:$0]  %s1343, 128, %s1345, [#allocation6]
    $region29: #{tpu_custom_call.1} parent=1 // pred_fallthru
      _
    // Predicated region
    $region30: #{tpu_custom_call.1} parent=1 // pred_check
      _
    $region31: #{tpu_custom_call.1} parent=1 // pred_check_branch
      %1349 = sbr.rel (0) target = $region33
    $region32: #{tpu_custom_call.1} parent=1 // pred_region
      %1351 = dma.done [#allocation6], 128
    $region33: #{tpu_custom_call.1} parent=1 // pred_fallthru
      _
    %1352 = vsyncpa [#allocation5], 1
    %1353 = vsyncpa [#allocation8], 1
    %1354 = vsyncpa [#allocation6], 1

</llo_original>
